<compile_context>
chip_gen: v5e
topology: v5e:2x2
jax: 0.10.0
libtpu: 0.0.40
codegen_flags: <defaults>
</compile_context>

<pallas_src>
import math

import jax
import jax.numpy as jnp
from jax.experimental import pallas as pl
from jax.experimental.pallas import tpu as pltpu


# ----------------------------------------------------------------------------
# Pallas kernel: fused encoding-linear + single-block GPT-2-style LM + tied lm_head
# grid = (B, nV): batch (parallel) x vocab tiles (arbitrary, transformer body runs at j==0)
# ----------------------------------------------------------------------------
def _tiny_gpt_kernel(x_ref, bias_ref, bsf_ref, encw_ref, wqkv_ref, wo_ref,
                     w1_ref, w2_ref, ln_ref, wteT_ref, o_ref, hf_ref):
    j = pl.program_id(1)  # vocab-tile index (innermost)

    @pl.when(j == 0)
    def _():
        def layernorm(h, g, b):
            mu = jnp.mean(h, axis=-1, keepdims=True)
            var = jnp.mean((h - mu) ** 2, axis=-1, keepdims=True)
            return (h - mu) * jax.lax.rsqrt(var + 1e-5) * g + b

        ln = ln_ref[...]  # (6, D) f32: ln1g, ln1b, ln2g, ln2b, lnfg, lnfb

        # Fused encoding-model linear: bsf is zero everywhere except the brain rows,
        # and the encoder bias was pre-placed in the brain slots of x, so one matmul
        # both projects the brain features and scatters them into the sequence.
        x = x_ref[0] + jnp.dot(bsf_ref[0].astype(jnp.bfloat16), encw_ref[...],
                               preferred_element_type=jnp.float32)        # (S, D) f32
        S, D = x.shape

        # --- causal self-attention (single head), fused QKV ---
        h1 = layernorm(x, ln[0:1, :], ln[1:2, :])
        qkv = jnp.dot(h1.astype(jnp.bfloat16), wqkv_ref[...],
                      preferred_element_type=jnp.float32)                 # (S, 3D)
        q = qkv[:, :D]
        k = qkv[:, D:2 * D]
        v = qkv[:, 2 * D:]
        scores = jax.lax.dot_general(
            q.astype(jnp.bfloat16), k.astype(jnp.bfloat16),
            dimension_numbers=(((1,), (1,)), ((), ())),
            preferred_element_type=jnp.float32) * (1.0 / math.sqrt(D))    # (S, S) f32
        # additive bias = causal AND key-not-padded, precomputed outside (f32).
        # NOTE: query rows whose own position is padded see every key masked; their
        # logits are garbage and must be ignored downstream (same as the original).
        scores = scores + bias_ref[0]
        smax = jnp.max(scores, axis=-1, keepdims=True)
        p = jnp.exp(scores - smax)
        p = p * pl.reciprocal(jnp.sum(p, axis=-1, keepdims=True), approx=True)
        ctx = jnp.dot(p.astype(jnp.bfloat16), v.astype(jnp.bfloat16),
                      preferred_element_type=jnp.float32)
        attn = jnp.dot(ctx.astype(jnp.bfloat16), wo_ref[...],
                       preferred_element_type=jnp.float32)
        x = x + attn

        # --- GeLU MLP ---
        h2 = layernorm(x, ln[2:3, :], ln[3:4, :])
        ff1 = jnp.dot(h2.astype(jnp.bfloat16), w1_ref[...],
                      preferred_element_type=jnp.float32)
        ff = jnp.dot(jax.nn.gelu(ff1, approximate=True).astype(jnp.bfloat16),
                     w2_ref[...], preferred_element_type=jnp.float32)
        x = x + ff

        # --- final LN, stash for the vocab-tile loop ---
        hf_ref[...] = layernorm(x, ln[4:5, :], ln[5:6, :])

    # tied lm_head over the j-th vocab tile (lane-dense, multiple-of-128 output tile)
    o_ref[0] = jnp.dot(hf_ref[...].astype(jnp.bfloat16), wteT_ref[...],
                       preferred_element_type=jnp.float32)


def tiny_gpt_forward(inputs_embeds, bs_full, attn_bias, lm):
    """inputs_embeds: (B,S,D) f32 (brain slots hold enc_b); bs_full: (B,S,N) f32
    (zero except brain rows); attn_bias: (B,S,S) f32 additive mask -> logits (B,S,V)."""
    B, S, D = inputs_embeds.shape
    N = bs_full.shape[-1]
    FF = lm["w1"].shape[1]
    V = lm["wteT"].shape[1]

    # vocab tile: keeps the (D, TV) lm_head weight + (1, S, TV) output double-buffered
    # and VMEM-safe even on v7x (64 MiB) when scaled to real GPT-2 vocab sizes.
    TV = V if V <= 2048 else 2048
    assert V % TV == 0 and (TV == V or TV % 128 == 0)
    nV = V // TV

    return pl.pallas_call(
        _tiny_gpt_kernel,
        out_shape=jax.ShapeDtypeStruct((B, S, V), jnp.float32),
        grid=(B, nV),
        in_specs=[
            pl.BlockSpec((1, S, D), lambda b, j: (b, 0, 0)),   # embeds (f32)
            pl.BlockSpec((1, S, S), lambda b, j: (b, 0, 0)),   # additive attn bias (f32)
            pl.BlockSpec((1, S, N), lambda b, j: (b, 0, 0)),   # zero-padded brain feats (f32)
            pl.BlockSpec((N, D), lambda b, j: (0, 0)),         # enc_w   (bf16)
            pl.BlockSpec((D, 3 * D), lambda b, j: (0, 0)),     # wqkv    (bf16)
            pl.BlockSpec((D, D), lambda b, j: (0, 0)),         # wo      (bf16)
            pl.BlockSpec((D, FF), lambda b, j: (0, 0)),        # w1      (bf16)
            pl.BlockSpec((FF, D), lambda b, j: (0, 0)),        # w2      (bf16)
            pl.BlockSpec((6, D), lambda b, j: (0, 0)),         # packed LN params (f32)
            pl.BlockSpec((D, TV), lambda b, j: (0, j)),        # wte^T tile (bf16)
        ],
        out_specs=pl.BlockSpec((1, S, TV), lambda b, j: (b, 0, j)),
        scratch_shapes=[pltpu.VMEM((S, D), jnp.float32)],      # final-LN hidden states
        compiler_params=pltpu.CompilerParams(
            dimension_semantics=("parallel", "arbitrary")),
    )(inputs_embeds, attn_bias, bs_full,
      lm["enc_w"], lm["wqkv"], lm["wo"], lm["w1"], lm["w2"], lm["ln"], lm["wteT"])


# ----------------------------------------------------------------------------
# Prompt_model (JAX/Pallas port of the PyTorch module's forward path)
# ----------------------------------------------------------------------------
class PromptModelPallas:
    def __init__(self, key, *, vocab=256, d_model=128, d_ff=256, n_feat=64,
                 n_new_tokens=2):
        self.args = {
            "model_name": "gpt2",
            "input_method": "normal",
            "fake_input": 0.0,   # -> always take the encoding-model branch (deterministic)
            "pos": None,
        }
        ks = jax.random.split(key, 12)
        s = 0.02
        D, V, FF, N = d_model, vocab, d_ff, n_feat

        wte = jax.random.normal(ks[0], (V, D), jnp.float32) * s
        wq = jax.random.normal(ks[1], (D, D), jnp.float32) * s
        wk = jax.random.normal(ks[2], (D, D), jnp.float32) * s
        wv = jax.random.normal(ks[3], (D, D), jnp.float32) * s
        wo = jax.random.normal(ks[4], (D, D), jnp.float32) * s
        w1 = jax.random.normal(ks[5], (D, FF), jnp.float32) * s
        w2 = jax.random.normal(ks[6], (FF, D), jnp.float32) * s
        enc_w = jax.random.normal(ks[7], (N, D), jnp.float32) * s
        enc_b = jax.random.normal(ks[8], (D,), jnp.float32) * s

        self.wte = wte            # f32 embedding table (token gather)
        self.enc_b = enc_b        # f32 encoder bias (pre-placed in brain slots)
        self.d_model = D

        # Hoisted / packed kernel operands (computed once, not per forward call):
        self.lm = {
            "enc_w": enc_w.astype(jnp.bfloat16),
            "wqkv": jnp.concatenate([wq, wk, wv], axis=1).astype(jnp.bfloat16),  # (D, 3D)
            "wo": wo.astype(jnp.bfloat16),
            "w1": w1.astype(jnp.bfloat16),
            "w2": w2.astype(jnp.bfloat16),
            "ln": jnp.concatenate(
                [jnp.ones((1, D)), jnp.zeros((1, D)),     # ln1 gamma/beta
                 jnp.ones((1, D)), jnp.zeros((1, D)),     # ln2 gamma/beta
                 jnp.ones((1, D)), jnp.zeros((1, D))],    # lnf gamma/beta
                axis=0).astype(jnp.float32),
            "wteT": wte.T.astype(jnp.bfloat16),           # tied lm_head, pre-transposed
        }

        # token_weights: rows of wte for the `new_tokens` (mimics wte.weight[new_token_id]).
        new_token_ids = jnp.array([V - 2, V - 1], jnp.int32)[:n_new_tokens]
        self.token_weights = wte[new_token_ids]

    # --- words2embedding: wte gather (glue; plain JAX) ---
    def words2embedding(self, input_ids):
        return self.wte[input_ids]

    # --- get_tokens: embed separator ids, overwrite last two with learned tokens ---
    def get_tokens(self, content_prev_sep):
        emb = self.words2embedding(content_prev_sep)          # (B, S_sep, D)
        emb = emb.at[:, -1].set(self.token_weights[-1])
        emb = emb.at[:, -2].set(self.token_weights[-2])
        return emb

    # --- get_prev (gpt2 branch): [sep[:, :1], <brain tokens>, sep[:, 1:]] ---
    def get_prev(self, brain_slot, content_prev_sep):
        return [content_prev_sep[:, :1, :], brain_slot, content_prev_sep[:, 1:, :]]

    # --- tokenize ---
    def tokenize(self, content_all, content_all_mask, additional_bs,
                 additional_bs_mask, content_prev_sep, use_fake=True, mode="train"):
        B, F, N = additional_bs.shape
        D = self.d_model
        content_all_emb = self.words2embedding(content_all)        # (B, S_text, D)
        content_prev_sep_emb = self.get_tokens(content_prev_sep)   # (B, S_sep, D)

        # TODO(synk): python random.random() fake-input branch is nondeterministic;
        # with args['fake_input']=0.0 the encoding-model path is always taken.
        # The encoding-model linear (bs @ enc_w + enc_b) is fused into the LM Pallas
        # kernel: here we only pre-place its bias in the brain slots and zero-pad the
        # raw brain features to the full sequence length.
        brain_bias_slot = jnp.broadcast_to(self.enc_b, (B, F, D))
        content_all_list = self.get_prev(brain_bias_slot, content_prev_sep_emb) + [
            content_all_emb
        ]
        embeds = jnp.concatenate(content_all_list, axis=-2)        # (B, S, D) f32
        mask = jnp.concatenate([additional_bs_mask, content_all_mask], axis=-1)

        S = embeds.shape[1]
        brain_offset = 1  # gpt2 layout: [sep0 | brain(F) | sep_rest | text]
        bs_full = jnp.zeros((B, S, N), jnp.float32)
        bs_full = jax.lax.dynamic_update_slice(
            bs_full, additional_bs.astype(jnp.float32), (0, brain_offset, 0))
        return embeds, mask, bs_full

    # --- forward ---
    def forward(self, content_all, content_all_mask, additional_bs,
                additional_bs_mask, content_prev_sep, use_fake=True, mode="train"):
        embeds, mask, bs_full = self.tokenize(
            content_all, content_all_mask, additional_bs, additional_bs_mask,
            content_prev_sep, use_fake, mode,
        )
        B, S, _ = embeds.shape
        # causal AND key-not-padded, folded into one additive f32 bias (hoisted out
        # of the kernel so the iota/compare is not redone per grid step).
        row = jnp.arange(S)[:, None]
        col = jnp.arange(S)[None, :]
        allowed = (row >= col)[None, :, :] & (mask[:, None, :] > 0)
        attn_bias = jnp.where(allowed, 0.0, -1e9).astype(jnp.float32)   # (B, S, S)

        # TODO(synk): the original wraps a pretrained HF LM; here it is a synthetic
        # deterministic single-block GPT-2-style LM implemented as a Pallas kernel.
        logits = tiny_gpt_forward(embeds, bs_full, attn_bias, self.lm)
        return logits, mask


# ----------------------------------------------------------------------------
if __name__ == "__main__":
    key = jax.random.PRNGKey(0)
    k_model, k_ids, k_sep, k_bs = jax.random.split(key, 4)

    B, S_TEXT, F, S_SEP, N_FEAT, V = 2, 9, 4, 3, 64, 256
    model = PromptModelPallas(k_model, vocab=V, d_model=128, d_ff=256,
                              n_feat=N_FEAT, n_new_tokens=2)

    content_all = jax.random.randint(k_ids, (B, S_TEXT), 0, V, jnp.int32)
    content_all_mask = jnp.ones((B, S_TEXT), jnp.int32)
    additional_bs = jax.random.normal(k_bs, (B, F, N_FEAT), jnp.float32)
    additional_bs_mask = jnp.ones((B, 1 + F + (S_SEP - 1)), jnp.int32)  # (B, 7)
    content_prev_sep = jax.random.randint(k_sep, (B, S_SEP), 0, V, jnp.int32)

    logits, out_mask = model.forward(
        content_all, content_all_mask, additional_bs, additional_bs_mask,
        content_prev_sep, use_fake=False, mode="train",
    )
    jax.block_until_ready((logits, out_mask))

    S_TOTAL = 1 + F + (S_SEP - 1) + S_TEXT   # 16
    assert logits.shape == (B, S_TOTAL, V)
    assert out_mask.shape == (B, S_TOTAL)
    assert bool(jnp.all(jnp.isfinite(logits)))
    print("KERNEL_OK")
</pallas_src>

<mosaic_0001>
module attributes {stable_mosaic.version = 11 : i64} {
  func.func @_tiny_gpt_kernel(%arg0: i32, %arg1: i32, %arg2: memref<1x16x128xf32, #tpu.memory_space<vmem>>, %arg3: memref<1x16x16xf32, #tpu.memory_space<vmem>>, %arg4: memref<1x16x64xf32, #tpu.memory_space<vmem>>, %arg5: memref<64x128xbf16, #tpu.memory_space<vmem>>, %arg6: memref<128x384xbf16, #tpu.memory_space<vmem>>, %arg7: memref<128x128xbf16, #tpu.memory_space<vmem>>, %arg8: memref<128x256xbf16, #tpu.memory_space<vmem>>, %arg9: memref<256x128xbf16, #tpu.memory_space<vmem>>, %arg10: memref<6x128xf32, #tpu.memory_space<vmem>>, %arg11: memref<128x256xbf16, #tpu.memory_space<vmem>>, %arg12: memref<1x16x256xf32, #tpu.memory_space<vmem>>, %arg13: memref<16x128xf32, #tpu.memory_space<vmem>>) attributes {dimension_semantics = [#tpu.dimension_semantics<parallel>, #tpu.dimension_semantics<arbitrary>], iteration_bounds = array<i64: 2, 1>, scalar_prefetch = 0 : i64, scratch_operands = 1 : i64, tpu.core_type = #tpu.core_type<tc>, window_params = [{transform_indices = @transform_0, window_bounds = array<i64: 1, 16, 128>}, {transform_indices = @transform_1, window_bounds = array<i64: 1, 16, 16>}, {transform_indices = @transform_2, window_bounds = array<i64: 1, 16, 64>}, {pipeline_mode = #tpu.pipeline_mode<synchronous>, transform_indices = @transform_3, window_bounds = array<i64: 64, 128>}, {pipeline_mode = #tpu.pipeline_mode<synchronous>, transform_indices = @transform_4, window_bounds = array<i64: 128, 384>}, {pipeline_mode = #tpu.pipeline_mode<synchronous>, transform_indices = @transform_5, window_bounds = array<i64: 128, 128>}, {pipeline_mode = #tpu.pipeline_mode<synchronous>, transform_indices = @transform_6, window_bounds = array<i64: 128, 256>}, {pipeline_mode = #tpu.pipeline_mode<synchronous>, transform_indices = @transform_7, window_bounds = array<i64: 256, 128>}, {pipeline_mode = #tpu.pipeline_mode<synchronous>, transform_indices = @transform_8, window_bounds = array<i64: 6, 128>}, {transform_indices = @transform_9, window_bounds = array<i64: 128, 256>}, {transform_indices = @transform_10, window_bounds = array<i64: 1, 16, 256>}]} {
    %c0_i32 = arith.constant 0 : i32
    %0 = arith.cmpi eq, %arg1, %c0_i32 : i32
    %1 = arith.extui %0 : i1 to i32
    %c0_i32_0 = arith.constant 0 : i32
    %2 = arith.cmpi ne, %1, %c0_i32_0 : i32
    scf.if %2 {
      %c0_7 = arith.constant 0 : index
      %c0_8 = arith.constant 0 : index
      %10 = vector.load %arg10[%c0_7, %c0_8] : memref<6x128xf32, #tpu.memory_space<vmem>>, vector<6x128xf32>
      %c0_9 = arith.constant 0 : index
      %c0_10 = arith.constant 0 : index
      %c0_11 = arith.constant 0 : index
      %11 = vector.load %arg2[%c0_9, %c0_10, %c0_11] : memref<1x16x128xf32, #tpu.memory_space<vmem>>, vector<1x16x128xf32>
      %12 = vector.shape_cast %11 : vector<1x16x128xf32> to vector<16x128xf32>
      %c0_12 = arith.constant 0 : index
      %c0_13 = arith.constant 0 : index
      %c0_14 = arith.constant 0 : index
      %13 = vector.load %arg4[%c0_12, %c0_13, %c0_14] : memref<1x16x64xf32, #tpu.memory_space<vmem>>, vector<1x16x64xf32>
      %14 = vector.shape_cast %13 : vector<1x16x64xf32> to vector<16x64xf32>
      %15 = arith.truncf %14 : vector<16x64xf32> to vector<16x64xbf16>
      %c0_15 = arith.constant 0 : index
      %c0_16 = arith.constant 0 : index
      %16 = vector.load %arg5[%c0_15, %c0_16] : memref<64x128xbf16, #tpu.memory_space<vmem>>, vector<64x128xbf16>
      %cst_17 = arith.constant dense<0.000000e+00> : vector<16x128xf32>
      %17 = tpu.matmul %15, %16, %cst_17 {dimension_numbers = #tpu.dot_dimension_numbers<[1], [0], [0], [1], [0, 0, 1, 1], [], []>} : vector<16x64xbf16>, vector<64x128xbf16>, vector<16x128xf32> -> vector<16x128xf32>
      %18 = arith.addf %12, %17 : vector<16x128xf32>
      %19 = vector.extract_strided_slice %10 {offsets = [0, 0], sizes = [1, 128], strides = [1, 1]} : vector<6x128xf32> to vector<1x128xf32>
      %20 = vector.extract_strided_slice %10 {offsets = [1, 0], sizes = [1, 128], strides = [1, 1]} : vector<6x128xf32> to vector<1x128xf32>
      %cst_18 = arith.constant dense<0.000000e+00> : vector<16xf32>
      %21 = vector.multi_reduction <add>, %18, %cst_18 [1] : vector<16x128xf32> to vector<16xf32>
      %22 = vector.shape_cast %21 : vector<16xf32> to vector<16x1xf32>
      %cst_19 = arith.constant 1.280000e+02 : f32
      %23 = vector.broadcast %cst_19 : f32 to vector<16x1xf32>
      %24 = arith.divf %22, %23 : vector<16x1xf32>
      %25 = vector.broadcast %24 : vector<16x1xf32> to vector<16x128xf32>
      %26 = arith.subf %18, %25 : vector<16x128xf32>
      %27 = arith.mulf %26, %26 : vector<16x128xf32>
      %cst_20 = arith.constant dense<0.000000e+00> : vector<16xf32>
      %28 = vector.multi_reduction <add>, %27, %cst_20 [1] : vector<16x128xf32> to vector<16xf32>
      %29 = vector.shape_cast %28 : vector<16xf32> to vector<16x1xf32>
      %cst_21 = arith.constant 1.280000e+02 : f32
      %30 = vector.broadcast %cst_21 : f32 to vector<16x1xf32>
      %31 = arith.divf %29, %30 : vector<16x1xf32>
      %32 = vector.broadcast %24 : vector<16x1xf32> to vector<16x128xf32>
      %33 = arith.subf %18, %32 : vector<16x128xf32>
      %cst_22 = arith.constant 9.99999974E-6 : f32
      %34 = vector.broadcast %cst_22 : f32 to vector<16x1xf32>
      %35 = arith.addf %31, %34 : vector<16x1xf32>
      %36 = math.rsqrt %35 : vector<16x1xf32>
      %37 = vector.broadcast %36 : vector<16x1xf32> to vector<16x128xf32>
      %38 = arith.mulf %33, %37 : vector<16x128xf32>
      %39 = vector.broadcast %19 : vector<1x128xf32> to vector<16x128xf32>
      %40 = arith.mulf %38, %39 : vector<16x128xf32>
      %41 = vector.broadcast %20 : vector<1x128xf32> to vector<16x128xf32>
      %42 = arith.addf %40, %41 : vector<16x128xf32>
      %43 = arith.truncf %42 : vector<16x128xf32> to vector<16x128xbf16>
      %c0_23 = arith.constant 0 : index
      %c0_24 = arith.constant 0 : index
      %44 = vector.load %arg6[%c0_23, %c0_24] : memref<128x384xbf16, #tpu.memory_space<vmem>>, vector<128x384xbf16>
      %cst_25 = arith.constant dense<0.000000e+00> : vector<16x384xf32>
      %45 = tpu.matmul %43, %44, %cst_25 {dimension_numbers = #tpu.dot_dimension_numbers<[1], [0], [0], [1], [0, 0, 1, 1], [], []>} : vector<16x128xbf16>, vector<128x384xbf16>, vector<16x384xf32> -> vector<16x384xf32>
      %46 = vector.extract_strided_slice %45 {offsets = [0, 0], sizes = [16, 128], strides = [1, 1]} : vector<16x384xf32> to vector<16x128xf32>
      %47 = vector.extract_strided_slice %45 {offsets = [0, 128], sizes = [16, 128], strides = [1, 1]} : vector<16x384xf32> to vector<16x128xf32>
      %48 = vector.extract_strided_slice %45 {offsets = [0, 256], sizes = [16, 128], strides = [1, 1]} : vector<16x384xf32> to vector<16x128xf32>
      %49 = arith.truncf %46 : vector<16x128xf32> to vector<16x128xbf16>
      %50 = arith.truncf %47 : vector<16x128xf32> to vector<16x128xbf16>
      %cst_26 = arith.constant dense<0.000000e+00> : vector<16x16xf32>
      %51 = tpu.matmul %49, %50, %cst_26 {dimension_numbers = #tpu.dot_dimension_numbers<[1], [1], [0], [0], [0, 0, 1, 0], [], []>} : vector<16x128xbf16>, vector<16x128xbf16>, vector<16x16xf32> -> vector<16x16xf32>
      %cst_27 = arith.constant 0.0883883461 : f32
      %52 = vector.broadcast %cst_27 : f32 to vector<16x16xf32>
      %53 = arith.mulf %51, %52 : vector<16x16xf32>
      %c0_28 = arith.constant 0 : index
      %c0_29 = arith.constant 0 : index
      %c0_30 = arith.constant 0 : index
      %54 = vector.load %arg3[%c0_28, %c0_29, %c0_30] : memref<1x16x16xf32, #tpu.memory_space<vmem>>, vector<1x16x16xf32>
      %55 = vector.shape_cast %54 : vector<1x16x16xf32> to vector<16x16xf32>
      %56 = arith.addf %53, %55 : vector<16x16xf32>
      %cst_31 = arith.constant dense<0xFF800000> : vector<16xf32>
      %57 = vector.multi_reduction <maximumf>, %56, %cst_31 [1] : vector<16x16xf32> to vector<16xf32>
      %58 = vector.shape_cast %57 : vector<16xf32> to vector<16x1xf32>
      %59 = vector.broadcast %58 : vector<16x1xf32> to vector<16x16xf32>
      %60 = arith.subf %56, %59 : vector<16x16xf32>
      %61 = math.exp %60 : vector<16x16xf32>
      %cst_32 = arith.constant dense<0.000000e+00> : vector<16xf32>
      %62 = vector.multi_reduction <add>, %61, %cst_32 [1] : vector<16x16xf32> to vector<16xf32>
      %63 = vector.shape_cast %62 : vector<16xf32> to vector<16x1xf32>
      %64 = tpu.reciprocal %63 {approx = true} : vector<16x1xf32> -> vector<16x1xf32>
      %65 = vector.broadcast %64 : vector<16x1xf32> to vector<16x16xf32>
      %66 = arith.mulf %61, %65 : vector<16x16xf32>
      %67 = arith.truncf %66 : vector<16x16xf32> to vector<16x16xbf16>
      %68 = arith.truncf %48 : vector<16x128xf32> to vector<16x128xbf16>
      %cst_33 = arith.constant dense<0.000000e+00> : vector<16x128xf32>
      %69 = tpu.matmul %67, %68, %cst_33 {dimension_numbers = #tpu.dot_dimension_numbers<[1], [0], [0], [1], [0, 0, 1, 1], [], []>} : vector<16x16xbf16>, vector<16x128xbf16>, vector<16x128xf32> -> vector<16x128xf32>
      %70 = arith.truncf %69 : vector<16x128xf32> to vector<16x128xbf16>
      %c0_34 = arith.constant 0 : index
      %c0_35 = arith.constant 0 : index
      %71 = vector.load %arg7[%c0_34, %c0_35] : memref<128x128xbf16, #tpu.memory_space<vmem>>, vector<128x128xbf16>
      %cst_36 = arith.constant dense<0.000000e+00> : vector<16x128xf32>
      %72 = tpu.matmul %70, %71, %cst_36 {dimension_numbers = #tpu.dot_dimension_numbers<[1], [0], [0], [1], [0, 0, 1, 1], [], []>} : vector<16x128xbf16>, vector<128x128xbf16>, vector<16x128xf32> -> vector<16x128xf32>
      %73 = arith.addf %18, %72 : vector<16x128xf32>
      %74 = vector.extract_strided_slice %10 {offsets = [2, 0], sizes = [1, 128], strides = [1, 1]} : vector<6x128xf32> to vector<1x128xf32>
      %75 = vector.extract_strided_slice %10 {offsets = [3, 0], sizes = [1, 128], strides = [1, 1]} : vector<6x128xf32> to vector<1x128xf32>
      %cst_37 = arith.constant dense<0.000000e+00> : vector<16xf32>
      %76 = vector.multi_reduction <add>, %73, %cst_37 [1] : vector<16x128xf32> to vector<16xf32>
      %77 = vector.shape_cast %76 : vector<16xf32> to vector<16x1xf32>
      %cst_38 = arith.constant 1.280000e+02 : f32
      %78 = vector.broadcast %cst_38 : f32 to vector<16x1xf32>
      %79 = arith.divf %77, %78 : vector<16x1xf32>
      %80 = vector.broadcast %79 : vector<16x1xf32> to vector<16x128xf32>
      %81 = arith.subf %73, %80 : vector<16x128xf32>
      %82 = arith.mulf %81, %81 : vector<16x128xf32>
      %cst_39 = arith.constant dense<0.000000e+00> : vector<16xf32>
      %83 = vector.multi_reduction <add>, %82, %cst_39 [1] : vector<16x128xf32> to vector<16xf32>
      %84 = vector.shape_cast %83 : vector<16xf32> to vector<16x1xf32>
      %cst_40 = arith.constant 1.280000e+02 : f32
      %85 = vector.broadcast %cst_40 : f32 to vector<16x1xf32>
      %86 = arith.divf %84, %85 : vector<16x1xf32>
      %87 = vector.broadcast %79 : vector<16x1xf32> to vector<16x128xf32>
      %88 = arith.subf %73, %87 : vector<16x128xf32>
      %cst_41 = arith.constant 9.99999974E-6 : f32
      %89 = vector.broadcast %cst_41 : f32 to vector<16x1xf32>
      %90 = arith.addf %86, %89 : vector<16x1xf32>
      %91 = math.rsqrt %90 : vector<16x1xf32>
      %92 = vector.broadcast %91 : vector<16x1xf32> to vector<16x128xf32>
      %93 = arith.mulf %88, %92 : vector<16x128xf32>
      %94 = vector.broadcast %74 : vector<1x128xf32> to vector<16x128xf32>
      %95 = arith.mulf %93, %94 : vector<16x128xf32>
      %96 = vector.broadcast %75 : vector<1x128xf32> to vector<16x128xf32>
      %97 = arith.addf %95, %96 : vector<16x128xf32>
      %98 = arith.truncf %97 : vector<16x128xf32> to vector<16x128xbf16>
      %c0_42 = arith.constant 0 : index
      %c0_43 = arith.constant 0 : index
      %99 = vector.load %arg8[%c0_42, %c0_43] : memref<128x256xbf16, #tpu.memory_space<vmem>>, vector<128x256xbf16>
      %cst_44 = arith.constant dense<0.000000e+00> : vector<16x256xf32>
      %100 = tpu.matmul %98, %99, %cst_44 {dimension_numbers = #tpu.dot_dimension_numbers<[1], [0], [0], [1], [0, 0, 1, 1], [], []>} : vector<16x128xbf16>, vector<128x256xbf16>, vector<16x256xf32> -> vector<16x256xf32>
      %101 = arith.mulf %100, %100 : vector<16x256xf32>
      %102 = arith.mulf %100, %101 : vector<16x256xf32>
      %cst_45 = arith.constant 4.471500e-02 : f32
      %103 = vector.broadcast %cst_45 : f32 to vector<16x256xf32>
      %104 = arith.mulf %103, %102 : vector<16x256xf32>
      %105 = arith.addf %100, %104 : vector<16x256xf32>
      %cst_46 = arith.constant 0.797884583 : f32
      %106 = vector.broadcast %cst_46 : f32 to vector<16x256xf32>
      %107 = arith.mulf %106, %105 : vector<16x256xf32>
      %108 = math.tanh %107 : vector<16x256xf32>
      %cst_47 = arith.constant 1.000000e+00 : f32
      %109 = vector.broadcast %cst_47 : f32 to vector<16x256xf32>
      %110 = arith.addf %109, %108 : vector<16x256xf32>
      %cst_48 = arith.constant 5.000000e-01 : f32
      %111 = vector.broadcast %cst_48 : f32 to vector<16x256xf32>
      %112 = arith.mulf %111, %110 : vector<16x256xf32>
      %113 = arith.mulf %100, %112 : vector<16x256xf32>
      %114 = arith.truncf %113 : vector<16x256xf32> to vector<16x256xbf16>
      %c0_49 = arith.constant 0 : index
      %c0_50 = arith.constant 0 : index
      %115 = vector.load %arg9[%c0_49, %c0_50] : memref<256x128xbf16, #tpu.memory_space<vmem>>, vector<256x128xbf16>
      %cst_51 = arith.constant dense<0.000000e+00> : vector<16x128xf32>
      %116 = tpu.matmul %114, %115, %cst_51 {dimension_numbers = #tpu.dot_dimension_numbers<[1], [0], [0], [1], [0, 0, 1, 1], [], []>} : vector<16x256xbf16>, vector<256x128xbf16>, vector<16x128xf32> -> vector<16x128xf32>
      %117 = arith.addf %73, %116 : vector<16x128xf32>
      %118 = vector.extract_strided_slice %10 {offsets = [4, 0], sizes = [1, 128], strides = [1, 1]} : vector<6x128xf32> to vector<1x128xf32>
      %119 = vector.extract_strided_slice %10 {offsets = [5, 0], sizes = [1, 128], strides = [1, 1]} : vector<6x128xf32> to vector<1x128xf32>
      %cst_52 = arith.constant dense<0.000000e+00> : vector<16xf32>
      %120 = vector.multi_reduction <add>, %117, %cst_52 [1] : vector<16x128xf32> to vector<16xf32>
      %121 = vector.shape_cast %120 : vector<16xf32> to vector<16x1xf32>
      %cst_53 = arith.constant 1.280000e+02 : f32
      %122 = vector.broadcast %cst_53 : f32 to vector<16x1xf32>
      %123 = arith.divf %121, %122 : vector<16x1xf32>
      %124 = vector.broadcast %123 : vector<16x1xf32> to vector<16x128xf32>
      %125 = arith.subf %117, %124 : vector<16x128xf32>
      %126 = arith.mulf %125, %125 : vector<16x128xf32>
      %cst_54 = arith.constant dense<0.000000e+00> : vector<16xf32>
      %127 = vector.multi_reduction <add>, %126, %cst_54 [1] : vector<16x128xf32> to vector<16xf32>
      %128 = vector.shape_cast %127 : vector<16xf32> to vector<16x1xf32>
      %cst_55 = arith.constant 1.280000e+02 : f32
      %129 = vector.broadcast %cst_55 : f32 to vector<16x1xf32>
      %130 = arith.divf %128, %129 : vector<16x1xf32>
      %131 = vector.broadcast %123 : vector<16x1xf32> to vector<16x128xf32>
      %132 = arith.subf %117, %131 : vector<16x128xf32>
      %cst_56 = arith.constant 9.99999974E-6 : f32
      %133 = vector.broadcast %cst_56 : f32 to vector<16x1xf32>
      %134 = arith.addf %130, %133 : vector<16x1xf32>
      %135 = math.rsqrt %134 : vector<16x1xf32>
      %136 = vector.broadcast %135 : vector<16x1xf32> to vector<16x128xf32>
      %137 = arith.mulf %132, %136 : vector<16x128xf32>
      %138 = vector.broadcast %118 : vector<1x128xf32> to vector<16x128xf32>
      %139 = arith.mulf %137, %138 : vector<16x128xf32>
      %140 = vector.broadcast %119 : vector<1x128xf32> to vector<16x128xf32>
      %141 = arith.addf %139, %140 : vector<16x128xf32>
      %c0_57 = arith.constant 0 : index
      %c0_58 = arith.constant 0 : index
      %142 = vector.load %arg13[%c0_57, %c0_58] : memref<16x128xf32, #tpu.memory_space<vmem>>, vector<16x128xf32>
      tpu.vector_store %arg13[%c0_57, %c0_58], %141 {strides = array<i32>} : memref<16x128xf32, #tpu.memory_space<vmem>>, vector<16x128xf32>,
    } else {
    }
    %c0 = arith.constant 0 : index
    %c0_1 = arith.constant 0 : index
    %3 = vector.load %arg13[%c0, %c0_1] : memref<16x128xf32, #tpu.memory_space<vmem>>, vector<16x128xf32>
    %4 = arith.truncf %3 : vector<16x128xf32> to vector<16x128xbf16>
    %c0_2 = arith.constant 0 : index
    %c0_3 = arith.constant 0 : index
    %5 = vector.load %arg11[%c0_2, %c0_3] : memref<128x256xbf16, #tpu.memory_space<vmem>>, vector<128x256xbf16>
    %cst = arith.constant dense<0.000000e+00> : vector<16x256xf32>
    %6 = tpu.matmul %4, %5, %cst {dimension_numbers = #tpu.dot_dimension_numbers<[1], [0], [0], [1], [0, 0, 1, 1], [], []>} : vector<16x128xbf16>, vector<128x256xbf16>, vector<16x256xf32> -> vector<16x256xf32>
    %c0_4 = arith.constant 0 : index
    %c0_5 = arith.constant 0 : index
    %c0_6 = arith.constant 0 : index
    %7 = vector.load %arg12[%c0_4, %c0_5, %c0_6] : memref<1x16x256xf32, #tpu.memory_space<vmem>>, vector<1x16x256xf32>
    %8 = vector.shape_cast %7 : vector<1x16x256xf32> to vector<16x256xf32>
    %9 = vector.shape_cast %6 : vector<16x256xf32> to vector<1x16x256xf32>
    tpu.vector_store %arg12[%c0_4, %c0_5, %c0_6], %9 {strides = array<i32>} : memref<1x16x256xf32, #tpu.memory_space<vmem>>, vector<1x16x256xf32>,
    return
  }
  func.func @transform_0(%arg0: i32, %arg1: i32) -> (i32, i32, i32) {
    %c0_i32 = arith.constant 0 : i32
    %c0_i32_0 = arith.constant 0 : i32
    %c0_i32_1 = arith.constant 0 : i32
    return %arg0, %c0_i32, %c0_i32_0 : i32, i32, i32
  }
  func.func @transform_1(%arg0: i32, %arg1: i32) -> (i32, i32, i32) {
    %c0_i32 = arith.constant 0 : i32
    %c0_i32_0 = arith.constant 0 : i32
    %c0_i32_1 = arith.constant 0 : i32
    return %arg0, %c0_i32, %c0_i32_0 : i32, i32, i32
  }
  func.func @transform_2(%arg0: i32, %arg1: i32) -> (i32, i32, i32) {
    %c0_i32 = arith.constant 0 : i32
    %c0_i32_0 = arith.constant 0 : i32
    %c0_i32_1 = arith.constant 0 : i32
    return %arg0, %c0_i32, %c0_i32_0 : i32, i32, i32
  }
  func.func @transform_3(%arg0: i32, %arg1: i32) -> (i32, i32) {
    %c0_i32 = arith.constant 0 : i32
    %c0_i32_0 = arith.constant 0 : i32
    %c0_i32_1 = arith.constant 0 : i32
    return %c0_i32, %c0_i32_0 : i32, i32
  }
  func.func @transform_4(%arg0: i32, %arg1: i32) -> (i32, i32) {
    %c0_i32 = arith.constant 0 : i32
    %c0_i32_0 = arith.constant 0 : i32
    %c0_i32_1 = arith.constant 0 : i32
    return %c0_i32, %c0_i32_0 : i32, i32
  }
  func.func @transform_5(%arg0: i32, %arg1: i32) -> (i32, i32) {
    %c0_i32 = arith.constant 0 : i32
    %c0_i32_0 = arith.constant 0 : i32
    %c0_i32_1 = arith.constant 0 : i32
    return %c0_i32, %c0_i32_0 : i32, i32
  }
  func.func @transform_6(%arg0: i32, %arg1: i32) -> (i32, i32) {
    %c0_i32 = arith.constant 0 : i32
    %c0_i32_0 = arith.constant 0 : i32
    %c0_i32_1 = arith.constant 0 : i32
    return %c0_i32, %c0_i32_0 : i32, i32
  }
  func.func @transform_7(%arg0: i32, %arg1: i32) -> (i32, i32) {
    %c0_i32 = arith.constant 0 : i32
    %c0_i32_0 = arith.constant 0 : i32
    %c0_i32_1 = arith.constant 0 : i32
    return %c0_i32, %c0_i32_0 : i32, i32
  }
  func.func @transform_8(%arg0: i32, %arg1: i32) -> (i32, i32) {
    %c0_i32 = arith.constant 0 : i32
    %c0_i32_0 = arith.constant 0 : i32
    %c0_i32_1 = arith.constant 0 : i32
    return %c0_i32, %c0_i32_0 : i32, i32
  }
  func.func @transform_9(%arg0: i32, %arg1: i32) -> (i32, i32) {
    %c0_i32 = arith.constant 0 : i32
    %c0_i32_0 = arith.constant 0 : i32
    return %c0_i32, %arg1 : i32, i32
  }
  func.func @transform_10(%arg0: i32, %arg1: i32) -> (i32, i32, i32) {
    %c0_i32 = arith.constant 0 : i32
    %c0_i32_0 = arith.constant 0 : i32
    return %arg0, %c0_i32, %arg1 : i32, i32, i32
  }
}

</mosaic_0001>

<llo_original>
// kernel: tpu_custom_call.1
$region0: #{tpu_custom_call.1}
  #allocation0 [shape = 'u32[]', space=smem, size = 0x4, offset = 0x4, fixed_abs, tag = 'smem constant byte address 0x4 - core index']
  #allocation1 [shape = 'u32[72,128]{1,0:T(1,128)}', space=vmem, size = 0x9000, scoped, tag = 'internal scratch']
  #allocation2 [shape = 'f32[16,128]{1,0:T(8,128)}', space=vmem, size = 0x2000, scoped, tag = 'scratch operand']
  %s0 = inlined_call_operand.hbm [shape: f32[2,16,128], index: 0, kind: input, shape index: {}]
  %s1 = inlined_call_operand.hbm [shape: f32[2,16,16], index: 1, kind: input, shape index: {}]
  %s2 = inlined_call_operand.hbm [shape: f32[2,16,64], index: 2, kind: input, shape index: {}]
  %s3 = inlined_call_operand.hbm [shape: bf16[64,128], index: 3, kind: input, shape index: {}]
  %s4 = inlined_call_operand.hbm [shape: bf16[128,384], index: 4, kind: input, shape index: {}]
  %s5 = inlined_call_operand.hbm [shape: bf16[128,128], index: 5, kind: input, shape index: {}]
  %s6 = inlined_call_operand.hbm [shape: bf16[128,256], index: 6, kind: input, shape index: {}]
  %s7 = inlined_call_operand.hbm [shape: bf16[256,128], index: 7, kind: input, shape index: {}]
  %s8 = inlined_call_operand.hbm [shape: f32[6,128], index: 8, kind: input, shape index: {}]
  %s9 = inlined_call_operand.hbm [shape: bf16[128,256], index: 9, kind: input, shape index: {}]
  %s10 = inlined_call_operand.hbm [shape: f32[2,16,256], index: 10, kind: output, shape index: {}]
  %s11 = sld [smem:[#allocation0]]
  $region117: #{tpu_custom_call.1} parent=0
    _
  %s13 = ssub.s32 1, %s11
  %s14 = scalar_select 0, %s13, %s11
  $region1: #{tpu_custom_call.1} parent=0
    #allocation3 [shape = 'u8[16384]{0}', space=vmem, size = 0x4000, scoped, tag = 'input window, operand 0']
    #allocation4 [shape = 's32[2]{0}', space=sflag, size = 0x8, scoped, tag = 'scoped memory for tpu_custom_call.1']
    #allocation5 [shape = 's32[2]{0}', space=sflag, size = 0x8, scoped, tag = 'scoped memory for tpu_custom_call.1']
    #allocation6 [shape = 'u8[16384]{0}', space=vmem, size = 0x4000, scoped, tag = 'input window, operand 1']
    #allocation7 [shape = 's32[2]{0}', space=sflag, size = 0x8, scoped, tag = 'scoped memory for tpu_custom_call.1']
    #allocation8 [shape = 'u8[16384]{0}', space=vmem, size = 0x4000, scoped, tag = 'input window, operand 2']
    #allocation9 [shape = 'u8[16384]{0}', space=vmem, size = 0x4000, scoped, tag = 'input window, operand 3, single buffered']
    #allocation10 [shape = 's32[1]{0}', space=sflag, size = 0x4, scoped, tag = 'scoped memory for tpu_custom_call.1']
    #allocation11 [shape = 'u8[98304]{0}', space=vmem, size = 0x18000, scoped, tag = 'input window, operand 4, single buffered']
    #allocation12 [shape = 'u8[32768]{0}', space=vmem, size = 0x8000, scoped, tag = 'input window, operand 5, single buffered']
    #allocation13 [shape = 's32[1]{0}', space=sflag, size = 0x4, scoped, tag = 'scoped memory for tpu_custom_call.1']
    #allocation14 [shape = 'u8[65536]{0}', space=vmem, size = 0x10000, scoped, tag = 'input window, operand 6, single buffered']
    #allocation15 [shape = 'u8[65536]{0}', space=vmem, size = 0x10000, scoped, tag = 'input window, operand 7, single buffered']
    #allocation16 [shape = 's32[1]{0}', space=sflag, size = 0x4, scoped, tag = 'scoped memory for tpu_custom_call.1']
    #allocation17 [shape = 'u8[4096]{0}', space=vmem, size = 0x1000, scoped, tag = 'input window, operand 8, single buffered']
    #allocation18 [shape = 'u8[65536]{0}', space=vmem, size = 0x10000, scoped, tag = 'input window, operand 9, single buffered']
    #allocation19 [shape = 's32[1]{0}', space=sflag, size = 0x4, scoped, tag = 'scoped memory for tpu_custom_call.1']
    #allocation20 [shape = 'u8[32768]{0}', space=vmem, size = 0x8000, scoped, tag = 'output window, operand 0']
    %15 = vsyncpa [#allocation4], 0
    %s16 = scalar_lea.sflag [#allocation4], 1
    %17 = vsyncpa %s16, 0
    %18 = vsyncpa [#allocation7], 0
    %s19 = scalar_lea.sflag [#allocation7], 1
    %20 = vsyncpa %s19, 0
    %21 = vsyncpa [#allocation10], 0
    %22 = vsyncpa [#allocation13], 0
    %23 = vsyncpa [#allocation16], 0
    %24 = vsyncpa [#allocation19], 0
    %25 = vsyncpa [#allocation5], 0
    %s26 = scalar_lea.sflag [#allocation5], 1
    %27 = vsyncpa %s26, 0
    loop: start=0, step=1, limit=4
    $region2: #{tpu_custom_call.1} parent=1 // loop_pre_header
      _
    $region3: #{tpu_custom_call.1} parent=1 // loop_header
      %s29 = sphi 0, %s33
      %p30 = scmp.ge.s32.totalorder %s29, 4
      %s36 = sphi 0, %s48
      %s37 = sphi 0, %s44
      %s38 = sphi 0, %s36
      %s39 = sphi 0, %s37
      %s40 = sphi 0, %s38
      %s41 = sphi 0, %s39
      %s51 = sphi 0, %s53
      %s54 = sphi 0, %s51
      %s55 = sphi 0, %s54
      %s71 = sphi 0, %s55
      %s77 = sphi 0, %s79
      %s80 = sphi 0, %s77
      %s81 = sphi 0, %s80
      %s97 = sphi 0, %s81
      %s103 = sphi 0, %s105
      %s106 = sphi 0, %s103
      %s107 = sphi 0, %s106
      %s123 = sphi 0, %s107
      %s127 = sphi 0, %s127
      %s129 = sphi 0, %s127
      %s130 = sphi 0, %s129
      %s144 = sphi 0, %s130
      %s148 = sphi 0, %s148
      %s150 = sphi 0, %s148
      %s151 = sphi 0, %s150
      %s165 = sphi 0, %s151
      %s169 = sphi 0, %s169
      %s171 = sphi 0, %s169
      %s172 = sphi 0, %s171
      %s186 = sphi 0, %s172
      %s190 = sphi 0, %s190
      %s192 = sphi 0, %s190
      %s193 = sphi 0, %s192
      %s207 = sphi 0, %s193
      %s211 = sphi 0, %s211
      %s213 = sphi 0, %s211
      %s214 = sphi 0, %s213
      %s228 = sphi 0, %s214
      %s232 = sphi 0, %s232
      %s234 = sphi 0, %s232
      %s235 = sphi 0, %s234
      %s249 = sphi 0, %s235
      %s255 = sphi 0, %s257
      %s258 = sphi 0, %s255
      %s259 = sphi 0, %s258
      %s275 = sphi 0, %s259
      %s283 = sphi 0, %s285
      %s286 = sphi 0, %s283
      %s287 = sphi 0, %s286
      %s303 = sphi 0, %s287
    $region4: #{tpu_custom_call.1} parent=1 // loop_header_branch
      %32 = sbr.rel (%p30) target = $region8
    $region5: #{tpu_custom_call.1} parent=1 // loop_body
      %s34 = ssub.s32 %s29, 1
      %s35 = ssub.s32 %s29, 2
      %s42 = sadd.s32 1, %s37
      %p43 = scmp.ge.s32.totalorder %s42, 1
      %s44 = scalar_select %p43, 0, %s42
      %s45 = sadd.s32 1, %s36
      %s46 = scalar_select %p43, %s45, %s36
      %p47 = scmp.ge.s32.totalorder %s46, 2
      %s48 = scalar_select %p47, 0, %s46
      %s49 = ssub.s32 %s36, %s48
      %p50 = scmp.eq.s32.totalorder %s49, 0
      %s52 = sadd.s32 %s51, 1
      %s53 = scalar_select %p50, %s51, %s52
      %p56 = pneg %p50
      %p57 = scmp.eq.s32.totalorder %s29, 1
      %p58 = por %p56, %p57
      %p59 = scmp.ne.s32.totalorder %s51, %s54
      %p60 = scmp.eq.s32.totalorder %s29, 0
      %p61 = por %p59, %p60
      %p62 = scmp.ne.s32.totalorder %s51, %s54
      %p63 = scmp.eq.s32.totalorder %s34, 1
      %p64 = por %p62, %p63
      %p65 = scmp.ne.s32.totalorder %s54, %s55
      %p66 = scmp.eq.s32.totalorder %s34, 0
      %p67 = por %p65, %p66
      %p68 = scmp.ne.s32.totalorder %s54, %s55
      %p69 = scmp.eq.s32.totalorder %s35, 1
      %p70 = por %p68, %p69
      %p72 = scmp.ne.s32.totalorder %s55, %s71
      %p73 = scmp.eq.s32.totalorder %s35, 0
      %p74 = por %p72, %p73
      %s75 = ssub.s32 %s36, %s48
      %p76 = scmp.eq.s32.totalorder %s75, 0
      %s78 = sadd.s32 %s77, 1
      %s79 = scalar_select %p76, %s77, %s78
      %p82 = pneg %p76
      %p83 = scmp.eq.s32.totalorder %s29, 1
      %p84 = por %p82, %p83
      %p85 = scmp.ne.s32.totalorder %s77, %s80
      %p86 = scmp.eq.s32.totalorder %s29, 0
      %p87 = por %p85, %p86
      %p88 = scmp.ne.s32.totalorder %s77, %s80
      %p89 = scmp.eq.s32.totalorder %s34, 1
      %p90 = por %p88, %p89
      %p91 = scmp.ne.s32.totalorder %s80, %s81
      %p92 = scmp.eq.s32.totalorder %s34, 0
      %p93 = por %p91, %p92
      %p94 = scmp.ne.s32.totalorder %s80, %s81
      %p95 = scmp.eq.s32.totalorder %s35, 1
      %p96 = por %p94, %p95
      %p98 = scmp.ne.s32.totalorder %s81, %s97
      %p99 = scmp.eq.s32.totalorder %s35, 0
      %p100 = por %p98, %p99
      %s101 = ssub.s32 %s36, %s48
      %p102 = scmp.eq.s32.totalorder %s101, 0
      %s104 = sadd.s32 %s103, 1
      %s105 = scalar_select %p102, %s103, %s104
      %p108 = pneg %p102
      %p109 = scmp.eq.s32.totalorder %s29, 1
      %p110 = por %p108, %p109
      %p111 = scmp.ne.s32.totalorder %s103, %s106
      %p112 = scmp.eq.s32.totalorder %s29, 0
      %p113 = por %p111, %p112
      %p114 = scmp.ne.s32.totalorder %s103, %s106
      %p115 = scmp.eq.s32.totalorder %s34, 1
      %p116 = por %p114, %p115
      %p117 = scmp.ne.s32.totalorder %s106, %s107
      %p118 = scmp.eq.s32.totalorder %s34, 0
      %p119 = por %p117, %p118
      %p120 = scmp.ne.s32.totalorder %s106, %s107
      %p121 = scmp.eq.s32.totalorder %s35, 1
      %p122 = por %p120, %p121
      %p124 = scmp.ne.s32.totalorder %s107, %s123
      %p125 = scmp.eq.s32.totalorder %s35, 0
      %p126 = por %p124, %p125
      %s128 = sadd.s32 %s127, 1
      %p131 = scmp.eq.s32.totalorder %s29, 1
      %p132 = scmp.ne.s32.totalorder %s127, %s129
      %p133 = scmp.eq.s32.totalorder %s29, 0
      %p134 = por %p132, %p133
      %p135 = scmp.ne.s32.totalorder %s127, %s129
      %p136 = scmp.eq.s32.totalorder %s34, 1
      %p137 = por %p135, %p136
      %p138 = scmp.ne.s32.totalorder %s129, %s130
      %p139 = scmp.eq.s32.totalorder %s34, 0
      %p140 = por %p138, %p139
      %p141 = scmp.ne.s32.totalorder %s129, %s130
      %p142 = scmp.eq.s32.totalorder %s35, 1
      %p143 = por %p141, %p142
      %p145 = scmp.ne.s32.totalorder %s130, %s144
      %p146 = scmp.eq.s32.totalorder %s35, 0
      %p147 = por %p145, %p146
      %s149 = sadd.s32 %s148, 1
      %p152 = scmp.eq.s32.totalorder %s29, 1
      %p153 = scmp.ne.s32.totalorder %s148, %s150
      %p154 = scmp.eq.s32.totalorder %s29, 0
      %p155 = por %p153, %p154
      %p156 = scmp.ne.s32.totalorder %s148, %s150
      %p157 = scmp.eq.s32.totalorder %s34, 1
      %p158 = por %p156, %p157
      %p159 = scmp.ne.s32.totalorder %s150, %s151
      %p160 = scmp.eq.s32.totalorder %s34, 0
      %p161 = por %p159, %p160
      %p162 = scmp.ne.s32.totalorder %s150, %s151
      %p163 = scmp.eq.s32.totalorder %s35, 1
      %p164 = por %p162, %p163
      %p166 = scmp.ne.s32.totalorder %s151, %s165
      %p167 = scmp.eq.s32.totalorder %s35, 0
      %p168 = por %p166, %p167
      %s170 = sadd.s32 %s169, 1
      %p173 = scmp.eq.s32.totalorder %s29, 1
      %p174 = scmp.ne.s32.totalorder %s169, %s171
      %p175 = scmp.eq.s32.totalorder %s29, 0
      %p176 = por %p174, %p175
      %p177 = scmp.ne.s32.totalorder %s169, %s171
      %p178 = scmp.eq.s32.totalorder %s34, 1
      %p179 = por %p177, %p178
      %p180 = scmp.ne.s32.totalorder %s171, %s172
      %p181 = scmp.eq.s32.totalorder %s34, 0
      %p182 = por %p180, %p181
      %p183 = scmp.ne.s32.totalorder %s171, %s172
      %p184 = scmp.eq.s32.totalorder %s35, 1
      %p185 = por %p183, %p184
      %p187 = scmp.ne.s32.totalorder %s172, %s186
      %p188 = scmp.eq.s32.totalorder %s35, 0
      %p189 = por %p187, %p188
      %s191 = sadd.s32 %s190, 1
      %p194 = scmp.eq.s32.totalorder %s29, 1
      %p195 = scmp.ne.s32.totalorder %s190, %s192
      %p196 = scmp.eq.s32.totalorder %s29, 0
      %p197 = por %p195, %p196
      %p198 = scmp.ne.s32.totalorder %s190, %s192
      %p199 = scmp.eq.s32.totalorder %s34, 1
      %p200 = por %p198, %p199
      %p201 = scmp.ne.s32.totalorder %s192, %s193
      %p202 = scmp.eq.s32.totalorder %s34, 0
      %p203 = por %p201, %p202
      %p204 = scmp.ne.s32.totalorder %s192, %s193
      %p205 = scmp.eq.s32.totalorder %s35, 1
      %p206 = por %p204, %p205
      %p208 = scmp.ne.s32.totalorder %s193, %s207
      %p209 = scmp.eq.s32.totalorder %s35, 0
      %p210 = por %p208, %p209
      %s212 = sadd.s32 %s211, 1
      %p215 = scmp.eq.s32.totalorder %s29, 1
      %p216 = scmp.ne.s32.totalorder %s211, %s213
      %p217 = scmp.eq.s32.totalorder %s29, 0
      %p218 = por %p216, %p217
      %p219 = scmp.ne.s32.totalorder %s211, %s213
      %p220 = scmp.eq.s32.totalorder %s34, 1
      %p221 = por %p219, %p220
      %p222 = scmp.ne.s32.totalorder %s213, %s214
      %p223 = scmp.eq.s32.totalorder %s34, 0
      %p224 = por %p222, %p223
      %p225 = scmp.ne.s32.totalorder %s213, %s214
      %p226 = scmp.eq.s32.totalorder %s35, 1
      %p227 = por %p225, %p226
      %p229 = scmp.ne.s32.totalorder %s214, %s228
      %p230 = scmp.eq.s32.totalorder %s35, 0
      %p231 = por %p229, %p230
      %s233 = sadd.s32 %s232, 1
      %p236 = scmp.eq.s32.totalorder %s29, 1
      %p237 = scmp.ne.s32.totalorder %s232, %s234
      %p238 = scmp.eq.s32.totalorder %s29, 0
      %p239 = por %p237, %p238
      %p240 = scmp.ne.s32.totalorder %s232, %s234
      %p241 = scmp.eq.s32.totalorder %s34, 1
      %p242 = por %p240, %p241
      %p243 = scmp.ne.s32.totalorder %s234, %s235
      %p244 = scmp.eq.s32.totalorder %s34, 0
      %p245 = por %p243, %p244
      %p246 = scmp.ne.s32.totalorder %s234, %s235
      %p247 = scmp.eq.s32.totalorder %s35, 1
      %p248 = por %p246, %p247
      %p250 = scmp.ne.s32.totalorder %s235, %s249
      %p251 = scmp.eq.s32.totalorder %s35, 0
      %p252 = por %p250, %p251
      %s253 = ssub.s32 %s37, %s44
      %p254 = scmp.eq.s32.totalorder %s253, 0
      %s256 = sadd.s32 %s255, 1
      %s257 = scalar_select %p254, %s255, %s256
      %p260 = pneg %p254
      %p261 = scmp.eq.s32.totalorder %s29, 1
      %p262 = por %p260, %p261
      %p263 = scmp.ne.s32.totalorder %s255, %s258
      %p264 = scmp.eq.s32.totalorder %s29, 0
      %p265 = por %p263, %p264
      %p266 = scmp.ne.s32.totalorder %s255, %s258
      %p267 = scmp.eq.s32.totalorder %s34, 1
      %p268 = por %p266, %p267
      %p269 = scmp.ne.s32.totalorder %s258, %s259
      %p270 = scmp.eq.s32.totalorder %s34, 0
      %p271 = por %p269, %p270
      %p272 = scmp.ne.s32.totalorder %s258, %s259
      %p273 = scmp.eq.s32.totalorder %s35, 1
      %p274 = por %p272, %p273
      %p276 = scmp.ne.s32.totalorder %s259, %s275
      %p277 = scmp.eq.s32.totalorder %s35, 0
      %p278 = por %p276, %p277
      %s279 = ssub.s32 %s36, %s48
      %s280 = ssub.s32 %s37, %s44
      %s281 = sor.u32 %s279, %s280
      %p282 = scmp.eq.s32.totalorder %s281, 0
      %s284 = sadd.s32 %s283, 1
      %s285 = scalar_select %p282, %s283, %s284
      %p288 = pneg %p282
      %p289 = scmp.eq.s32.totalorder %s29, 1
      %p290 = por %p288, %p289
      %p291 = scmp.ne.s32.totalorder %s283, %s286
      %p292 = scmp.eq.s32.totalorder %s29, 0
      %p293 = por %p291, %p292
      %p294 = scmp.ne.s32.totalorder %s283, %s286
      %p295 = scmp.eq.s32.totalorder %s34, 1
      %p296 = por %p294, %p295
      %p297 = scmp.ne.s32.totalorder %s286, %s287
      %p298 = scmp.eq.s32.totalorder %s34, 0
      %p299 = por %p297, %p298
      %p300 = scmp.ne.s32.totalorder %s286, %s287
      %p301 = scmp.eq.s32.totalorder %s35, 1
      %p302 = por %p300, %p301
      %p304 = scmp.ne.s32.totalorder %s287, %s303
      %p305 = scmp.eq.s32.totalorder %s35, 0
      %p306 = por %p304, %p305
      %p307 = scmp.le.s32.totalorder 1, %s29
      %p308 = scmp.lt.s32.totalorder %s29, 3
      %p309 = pnand %p307, %p308
      %p310 = pneg %p309
      // Predicated region
      $region9: #{tpu_custom_call.1} parent=5 // pred_check
        _
      $region10: #{tpu_custom_call.1} parent=5 // pred_check_branch
        %312 = sbr.rel (%p309) target = $region12
      $region11: #{tpu_custom_call.1} parent=5 // pred_region
        %s313 = ssub.s32 %s29, 1
        // Predicated region
        $region13: #{tpu_custom_call.1} parent=11 // pred_check
          %p314 = pneg %p140
        $region14: #{tpu_custom_call.1} parent=11 // pred_check_branch
          %316 = sbr.rel (%p314) target = $region16
        $region15: #{tpu_custom_call.1} parent=11 // pred_region
          %318 = vsyncadd [#allocation10], 0
          %s319 = sshll.u32 %s3, 4
          %s320 = int_to_ptr.hbm [resolvable:$true] %s319
          %s321 = sshll.u32 [#allocation9], 4
          %s322 = int_to_ptr.vmem [resolvable:$true] %s321
          %327 = dma.hbm_to_vmem [thread:$0]  %s320, 512, %s322, [#allocation10], 64, 64, 4
        $region16: #{tpu_custom_call.1} parent=11 // pred_fallthru
          _
        // Predicated region
        $region17: #{tpu_custom_call.1} parent=11 // pred_check
          %p328 = pneg %p161
        $region18: #{tpu_custom_call.1} parent=11 // pred_check_branch
          %330 = sbr.rel (%p328) target = $region20
        $region19: #{tpu_custom_call.1} parent=11 // pred_region
          %332 = vsyncadd [#allocation10], 0
          %s333 = sshll.u32 %s4, 4
          %s334 = int_to_ptr.hbm [resolvable:$true] %s333
          %s335 = sshll.u32 [#allocation11], 4
          %s336 = int_to_ptr.vmem [resolvable:$true] %s335
          %341 = dma.hbm_to_vmem [thread:$0]  %s334, 3072, %s336, [#allocation10], 192, 192, 12
        $region20: #{tpu_custom_call.1} parent=11 // pred_fallthru
          _
        // Predicated region
        $region21: #{tpu_custom_call.1} parent=11 // pred_check
          %p342 = pneg %p182
        $region22: #{tpu_custom_call.1} parent=11 // pred_check_branch
          %344 = sbr.rel (%p342) target = $region24
        $region23: #{tpu_custom_call.1} parent=11 // pred_region
          %346 = vsyncadd [#allocation13], 0
          %s347 = sshll.u32 %s5, 4
          %s348 = int_to_ptr.hbm [resolvable:$true] %s347
          %s349 = sshll.u32 [#allocation12], 4
          %s350 = int_to_ptr.vmem [resolvable:$true] %s349
          %355 = dma.hbm_to_vmem [thread:$0]  %s348, 1024, %s350, [#allocation13], 64, 64, 4
        $region24: #{tpu_custom_call.1} parent=11 // pred_fallthru
          _
        // Predicated region
        $region25: #{tpu_custom_call.1} parent=11 // pred_check
          %p356 = pneg %p203
        $region26: #{tpu_custom_call.1} parent=11 // pred_check_branch
          %358 = sbr.rel (%p356) target = $region28
        $region27: #{tpu_custom_call.1} parent=11 // pred_region
          %360 = vsyncadd [#allocation13], 0
          %s361 = sshll.u32 %s6, 4
          %s362 = int_to_ptr.hbm [resolvable:$true] %s361
          %s363 = sshll.u32 [#allocation14], 4
          %s364 = int_to_ptr.vmem [resolvable:$true] %s363
          %369 = dma.hbm_to_vmem [thread:$0]  %s362, 2048, %s364, [#allocation13], 128, 128, 8
        $region28: #{tpu_custom_call.1} parent=11 // pred_fallthru
          _
        // Predicated region
        $region29: #{tpu_custom_call.1} parent=11 // pred_check
          %p370 = pneg %p224
        $region30: #{tpu_custom_call.1} parent=11 // pred_check_branch
          %372 = sbr.rel (%p370) target = $region32
        $region31: #{tpu_custom_call.1} parent=11 // pred_region
          %374 = vsyncadd [#allocation16], 0
          %s375 = sshll.u32 %s7, 4
          %s376 = int_to_ptr.hbm [resolvable:$true] %s375
          %s377 = sshll.u32 [#allocation15], 4
          %s378 = int_to_ptr.vmem [resolvable:$true] %s377
          %383 = dma.hbm_to_vmem [thread:$0]  %s376, 2048, %s378, [#allocation16], 64, 64, 4
        $region32: #{tpu_custom_call.1} parent=11 // pred_fallthru
          _
        // Predicated region
        $region33: #{tpu_custom_call.1} parent=11 // pred_check
          %p384 = pneg %p245
        $region34: #{tpu_custom_call.1} parent=11 // pred_check_branch
          %386 = sbr.rel (%p384) target = $region36
        $region35: #{tpu_custom_call.1} parent=11 // pred_region
          %388 = vsyncadd [#allocation16], 0
          %s390 = sshll.u32 %s8, 4
          %s391 = int_to_ptr.hbm [resolvable:$true] %s390
          %s392 = sshll.u32 [#allocation17], 4
          %s393 = int_to_ptr.vmem [resolvable:$true] %s392
          %395 = dma.hbm_to_vmem [thread:$0]  %s391, 128, %s393, [#allocation16]
        $region36: #{tpu_custom_call.1} parent=11 // pred_fallthru
          _
        // Predicated region
        $region37: #{tpu_custom_call.1} parent=11 // pred_check
          %p396 = pneg %p271
        $region38: #{tpu_custom_call.1} parent=11 // pred_check_branch
          %398 = sbr.rel (%p396) target = $region40
        $region39: #{tpu_custom_call.1} parent=11 // pred_region
          %s399 = smul.u32 2, %s39
          %401 = vsyncadd [#allocation19], 0
          %s402 = smul.addr %s399, 4
          %s403 = scalar_lea.hbm %s9, %s402
          %s404 = sshll.u32 %s403, 4
          %s405 = int_to_ptr.hbm [resolvable:$true] %s404
          %s406 = sshll.u32 [#allocation18], 4
          %s407 = int_to_ptr.vmem [resolvable:$true] %s406
          %412 = dma.hbm_to_vmem [thread:$0]  %s405, 2048, %s407, [#allocation19], 128, 128, 8
        $region40: #{tpu_custom_call.1} parent=11 // pred_fallthru
          _
      $region12: #{tpu_custom_call.1} parent=5 // pred_fallthru
        _
      %p413 = scmp.lt.s32.totalorder %s29, 2
      // Predicated region
      $region41: #{tpu_custom_call.1} parent=5 // pred_check
        %p414 = pneg %p413
      $region42: #{tpu_custom_call.1} parent=5 // pred_check_branch
        %416 = sbr.rel (%p414) target = $region44
      $region43: #{tpu_custom_call.1} parent=5 // pred_region
        // Predicated region
        $region45: #{tpu_custom_call.1} parent=43 // pred_check
          %p417 = pneg %p61
        $region46: #{tpu_custom_call.1} parent=43 // pred_check_branch
          %419 = sbr.rel (%p417) target = $region48
        $region47: #{tpu_custom_call.1} parent=43 // pred_region
          %s420 = sand.u32 %s51, 1
          %s421 = scalar_lea.sflag [#allocation4], %s420
          %s422 = sand.u32 %s51, 1
          %s423 = smul.addr %s422, 16
          %s424 = scalar_lea.vmem [#allocation3], %s423
          %426 = vsyncadd %s421, 0
          %s427 = smul.addr %s36, 2
          %s428 = smul.addr %s427, 8
          %s429 = scalar_lea.hbm %s0, %s428
          %s430 = sshll.u32 %s429, 4
          %s431 = int_to_ptr.hbm [resolvable:$true] %s430
          %s432 = sshll.u32 %s424, 4
          %s433 = int_to_ptr.vmem [resolvable:$true] %s432
          %438 = dma.hbm_to_vmem [thread:$0]  %s431, 256, %s433, %s421, 128, 128, 8
        $region48: #{tpu_custom_call.1} parent=43 // pred_fallthru
          _
        // Predicated region
        $region49: #{tpu_custom_call.1} parent=43 // pred_check
          %p439 = pneg %p87
        $region50: #{tpu_custom_call.1} parent=43 // pred_check_branch
          %441 = sbr.rel (%p439) target = $region52
        $region51: #{tpu_custom_call.1} parent=43 // pred_region
          %s442 = sand.u32 %s29, 1
          %s443 = scalar_lea.sflag [#allocation7], %s442
          %s444 = sand.u32 %s77, 1
          %s445 = smul.addr %s444, 16
          %s446 = scalar_lea.vmem [#allocation6], %s445
          %448 = vsyncadd %s443, 0
          %s449 = smul.addr %s36, 2
          %s450 = smul.addr %s449, 8
          %s451 = scalar_lea.hbm %s1, %s450
          %s452 = sshll.u32 %s451, 4
          %s453 = int_to_ptr.hbm [resolvable:$true] %s452
          %s454 = sshll.u32 %s446, 4
          %s455 = int_to_ptr.vmem [resolvable:$true] %s454
          %460 = dma.hbm_to_vmem [thread:$0]  %s453, 256, %s455, %s443, 128, 128, 8
        $region52: #{tpu_custom_call.1} parent=43 // pred_fallthru
          _
        // Predicated region
        $region53: #{tpu_custom_call.1} parent=43 // pred_check
          %p461 = pneg %p113
        $region54: #{tpu_custom_call.1} parent=43 // pred_check_branch
          %463 = sbr.rel (%p461) target = $region56
        $region55: #{tpu_custom_call.1} parent=43 // pred_region
          %s464 = sand.u32 %s29, 1
          %s465 = scalar_lea.sflag [#allocation7], %s464
          %s466 = sand.u32 %s103, 1
          %s467 = smul.addr %s466, 16
          %s468 = scalar_lea.vmem [#allocation8], %s467
          %470 = vsyncadd %s465, 0
          %s471 = smul.addr %s36, 2
          %s472 = smul.addr %s471, 8
          %s473 = scalar_lea.hbm %s2, %s472
          %s474 = sshll.u32 %s473, 4
          %s475 = int_to_ptr.hbm [resolvable:$true] %s474
          %s476 = sshll.u32 %s468, 4
          %s477 = int_to_ptr.vmem [resolvable:$true] %s476
          %482 = dma.hbm_to_vmem [thread:$0]  %s475, 256, %s477, %s465, 128, 128, 8
        $region56: #{tpu_custom_call.1} parent=43 // pred_fallthru
          _
      $region44: #{tpu_custom_call.1} parent=5 // pred_fallthru
        _
      %p483 = scmp.le.s32.totalorder 1, %s29
      %p484 = scmp.lt.s32.totalorder %s29, 3
      %p485 = pnand %p483, %p484
      %p486 = pneg %p485
      // Predicated region
      $region57: #{tpu_custom_call.1} parent=5 // pred_check
        _
      $region58: #{tpu_custom_call.1} parent=5 // pred_check_branch
        %488 = sbr.rel (%p485) target = $region60
      $region59: #{tpu_custom_call.1} parent=5 // pred_region
        %s489 = ssub.s32 %s29, 1
        %s490 = sand.u32 %s54, 1
        %s491 = scalar_lea.sflag [#allocation4], %s490
        %s492 = sand.u32 %s54, 1
        %s493 = smul.addr %s492, 16
        %s494 = scalar_lea.vmem [#allocation3], %s493
        // Predicated region
        $region61: #{tpu_custom_call.1} parent=59 // pred_check
          %p495 = pneg %p67
        $region62: #{tpu_custom_call.1} parent=59 // pred_check_branch
          %497 = sbr.rel (%p495) target = $region64
        $region63: #{tpu_custom_call.1} parent=59 // pred_region
          %499 = dma.done %s491, 256
        $region64: #{tpu_custom_call.1} parent=59 // pred_fallthru
          _
        %s500 = sand.u32 %s34, 1
        %s501 = scalar_lea.sflag [#allocation7], %s500
        %s502 = sand.u32 %s80, 1
        %s503 = smul.addr %s502, 16
        %s504 = scalar_lea.vmem [#allocation6], %s503
        // Predicated region
        $region65: #{tpu_custom_call.1} parent=59 // pred_check
          %p505 = pneg %p93
        $region66: #{tpu_custom_call.1} parent=59 // pred_check_branch
          %507 = sbr.rel (%p505) target = $region68
        $region67: #{tpu_custom_call.1} parent=59 // pred_region
          %509 = dma.done %s501, 256
        $region68: #{tpu_custom_call.1} parent=59 // pred_fallthru
          _
        %s510 = sand.u32 %s34, 1
        %s511 = scalar_lea.sflag [#allocation7], %s510
        %s512 = sand.u32 %s106, 1
        %s513 = smul.addr %s512, 16
        %s514 = scalar_lea.vmem [#allocation8], %s513
        // Predicated region
        $region69: #{tpu_custom_call.1} parent=59 // pred_check
          %p515 = pneg %p119
        $region70: #{tpu_custom_call.1} parent=59 // pred_check_branch
          %517 = sbr.rel (%p515) target = $region72
        $region71: #{tpu_custom_call.1} parent=59 // pred_region
          %519 = dma.done %s511, 256
        $region72: #{tpu_custom_call.1} parent=59 // pred_fallthru
          _
        // Predicated region
        $region73: #{tpu_custom_call.1} parent=59 // pred_check
          %p520 = pneg %p140
        $region74: #{tpu_custom_call.1} parent=59 // pred_check_branch
          %522 = sbr.rel (%p520) target = $region76
        $region75: #{tpu_custom_call.1} parent=59 // pred_region
          %524 = dma.done [#allocation10], 512
        $region76: #{tpu_custom_call.1} parent=59 // pred_fallthru
          _
        // Predicated region
        $region77: #{tpu_custom_call.1} parent=59 // pred_check
          %p525 = pneg %p161
        $region78: #{tpu_custom_call.1} parent=59 // pred_check_branch
          %527 = sbr.rel (%p525) target = $region80
        $region79: #{tpu_custom_call.1} parent=59 // pred_region
          %529 = dma.done [#allocation10], 3072
        $region80: #{tpu_custom_call.1} parent=59 // pred_fallthru
          _
        // Predicated region
        $region81: #{tpu_custom_call.1} parent=59 // pred_check
          %p530 = pneg %p182
        $region82: #{tpu_custom_call.1} parent=59 // pred_check_branch
          %532 = sbr.rel (%p530) target = $region84
        $region83: #{tpu_custom_call.1} parent=59 // pred_region
          %534 = dma.done [#allocation13], 1024
        $region84: #{tpu_custom_call.1} parent=59 // pred_fallthru
          _
        // Predicated region
        $region85: #{tpu_custom_call.1} parent=59 // pred_check
          %p535 = pneg %p203
        $region86: #{tpu_custom_call.1} parent=59 // pred_check_branch
          %537 = sbr.rel (%p535) target = $region88
        $region87: #{tpu_custom_call.1} parent=59 // pred_region
          %539 = dma.done [#allocation13], 2048
        $region88: #{tpu_custom_call.1} parent=59 // pred_fallthru
          _
        // Predicated region
        $region89: #{tpu_custom_call.1} parent=59 // pred_check
          %p540 = pneg %p224
        $region90: #{tpu_custom_call.1} parent=59 // pred_check_branch
          %542 = sbr.rel (%p540) target = $region92
        $region91: #{tpu_custom_call.1} parent=59 // pred_region
          %544 = dma.done [#allocation16], 2048
        $region92: #{tpu_custom_call.1} parent=59 // pred_fallthru
          _
        // Predicated region
        $region93: #{tpu_custom_call.1} parent=59 // pred_check
          %p545 = pneg %p245
        $region94: #{tpu_custom_call.1} parent=59 // pred_check_branch
          %547 = sbr.rel (%p545) target = $region96
        $region95: #{tpu_custom_call.1} parent=59 // pred_region
          %549 = dma.done [#allocation16], 128
        $region96: #{tpu_custom_call.1} parent=59 // pred_fallthru
          _
        // Predicated region
        $region97: #{tpu_custom_call.1} parent=59 // pred_check
          %p550 = pneg %p271
        $region98: #{tpu_custom_call.1} parent=59 // pred_check_branch
          %552 = sbr.rel (%p550) target = $region100
        $region99: #{tpu_custom_call.1} parent=59 // pred_region
          %554 = dma.done [#allocation19], 2048
        $region100: #{tpu_custom_call.1} parent=59 // pred_fallthru
          _
        %s555 = sand.u32 %s54, 1
        %s556 = scalar_lea.sflag [#allocation4], %s555
        %s557 = sand.u32 %s54, 1
        %s558 = smul.addr %s557, 16
        %s559 = scalar_lea.vmem [#allocation3], %s558
        %p560 = pneg %p67
        %p561 = pneg %p64
        %s562 = sand.u32 %s34, 1
        %s563 = scalar_lea.sflag [#allocation7], %s562
        %s564 = sand.u32 %s80, 1
        %s565 = smul.addr %s564, 16
        %s566 = scalar_lea.vmem [#allocation6], %s565
        %p567 = pneg %p93
        %p568 = pneg %p90
        %s569 = sand.u32 %s34, 1
        %s570 = scalar_lea.sflag [#allocation7], %s569
        %s571 = sand.u32 %s106, 1
        %s572 = smul.addr %s571, 16
        %s573 = scalar_lea.vmem [#allocation8], %s572
        %p574 = pneg %p119
        %p575 = pneg %p116
        %p576 = pneg %p140
        %p577 = pneg %p137
        %p578 = pneg %p161
        %p579 = pneg %p158
        %p580 = pneg %p182
        %p581 = pneg %p179
        %p582 = pneg %p203
        %p583 = pneg %p200
        %p584 = pneg %p224
        %p585 = pneg %p221
        %p586 = pneg %p245
        %p587 = pneg %p242
        %p588 = pneg %p271
        %p589 = pneg %p268
        %p590 = pneg %p299
        %p591 = pneg %p296
        %s592 = sand.u32 %s286, 1
        %s593 = scalar_lea.sflag [#allocation5], %s592
        %s594 = sand.u32 %s286, 1
        %s595 = smul.addr %s594, 32
        %s596 = scalar_lea.vmem [#allocation20], %s595
        %s597 = smul.u32 2, %s39
        %s598 = smul.u32 2, %s39
        %p600 = scmp.eq.s32.totalorder %s39, 0
        // Predicated region
        $region101: #{tpu_custom_call.1} parent=59 // pred_check
          %p601 = pneg %p600
        $region102: #{tpu_custom_call.1} parent=59 // pred_check_branch
          %603 = sbr.rel (%p601) target = $region104
        $region103: #{tpu_custom_call.1} parent=59 // pred_region
          %v604 = vld [vmem:[#allocation17] sm:$0x3f]
          %v605 = vld [vmem:[%s494] sm:$0xff]
          %v606 = vld [vmem:[%s494 + $0x8] sm:$0xff]
          %v607 = vld [vmem:[%s514] sm:$0xff]
          %v608 = vld [vmem:[%s514 + $0x8] sm:$0xff]
          %v609 = vpack.c.bf16 %v608, %v607
          %v610 = vld [vmem:[#allocation9] sm:$0xf]
          %v611 = vld [vmem:[#allocation9 + $0x4] sm:$0xf]
          %v612 = vld [vmem:[#allocation9 + $0x8] sm:$0xf]
          %v613 = vld [vmem:[#allocation9 + $0xc] sm:$0xf]
          %v614 = vld [vmem:[#allocation9 + $0x10] sm:$0xf]
          %v615 = vld [vmem:[#allocation9 + $0x14] sm:$0xf]
          %v616 = vld [vmem:[#allocation9 + $0x18] sm:$0xf]
          %v617 = vld [vmem:[#allocation9 + $0x1c] sm:$0xf]
          %v626 = vunpack.c.l.b16 %v610
          %v627 = vunpack.c.l.b16 %v611
          %v628 = vunpack.c.l.b16 %v612
          %v629 = vunpack.c.l.b16 %v613
          %v630 = vunpack.c.l.b16 %v614
          %v631 = vunpack.c.l.b16 %v615
          %v632 = vunpack.c.l.b16 %v616
          %v633 = vunpack.c.l.b16 %v617
          %v634 = vpack.c.b16 %v627, %v626
          %v635 = vpack.c.b16 %v629, %v628
          %v636 = vpack.c.b16 %v631, %v630
          %v637 = vpack.c.b16 %v633, %v632
          %vm642 = vcmask 523264
          %v644 = vsel %vm642, %v609, 0
          %646 = vmatpush.bf16.msra.mxu0 0
          %647 = vmatpush.bf16.msra.mxu0 0
          %648 = vmatpush.bf16.msra.mxu0 0
          %649 = vmatpush.bf16.msra.mxu0 0
          %650 = vmatpush.bf16.msra.mxu0 %v637
          %651 = vmatpush.bf16.msra.mxu0 %v636
          %652 = vmatpush.bf16.msra.mxu0 %v635
          %653 = vmatpush.bf16.msra.mxu0 %v634
          %654 = vmatmul.bf16.gmra.mxu0 %v644
          %v655 = vpop.f32.mrf.mxu0
          %v656 = vadd.f32 0.0, %v655
          %v657 = vpop.f32.mrf.mxu0
          %v658 = vadd.f32 0.0, %v657
          %659 = vdwg.mxu0
          %v660 = vadd.f32 %v605, %v656
          %v661 = vadd.f32 %v606, %v658
          %662 = vadd.xlane.f32.xlu0 %v660
          %v663 = vpop.xlane.xlu0 %662
          %664 = vadd.xlane.f32.xlu0 %v661
          %v665 = vpop.xlane.xlu0 %664
          %v666 = vrcp.pop 128.0
          %v667 = vmul.f32 128.0, %v666
          %v668 = vsub.f32 1.0, %v667
          %v669 = vmul.f32 %v666, %v668
          %v670 = vadd.f32 %v666, %v669
          %vm671 = vweird.f32 %v666
          %v672 = vsel %vm671, %v666, %v670
          %v673 = vmul.f32 %v663, %v672
          %v674 = vmul.f32 %v665, %v672
          %v675 = vsub.f32 %v660, %v673
          %v676 = vsub.f32 %v661, %v674
          %v677 = vmul.f32 %v675, %v675
          %v678 = vmul.f32 %v676, %v676
          %679 = vadd.xlane.f32.xlu0 %v677
          %v680 = vpop.xlane.xlu0 %679
          %681 = vadd.xlane.f32.xlu0 %v678
          %v682 = vpop.xlane.xlu0 %681
          %v683 = vmul.f32 %v680, %v672
          %v684 = vmul.f32 %v682, %v672
          %v685 = vadd.f32 %v683, 1e-05
          %v686 = vadd.f32 %v684, 1e-05
          %v687 = vrsqrt.pop %v685
          %v688 = vmul.f32 %v687, %v685
          %v689 = vmul.f32 %v688, %v687
          %v690 = vmul.f32 0.5, %v689
          %v691 = vsub.f32 1.5, %v690
          %v692 = vmul.f32 %v687, %v691
          %vm693 = vweird.f32 %v685
          %vm694 = vweird.f32 %v687
          %vm695 = vmor %vm693, %vm694
          %v696 = vsel %vm695, %v687, %v692
          %v697 = vrsqrt.pop %v686
          %v698 = vmul.f32 %v697, %v686
          %v699 = vmul.f32 %v698, %v697
          %v700 = vmul.f32 0.5, %v699
          %v701 = vsub.f32 1.5, %v700
          %v702 = vmul.f32 %v697, %v701
          %vm703 = vweird.f32 %v686
          %vm704 = vweird.f32 %v697
          %vm705 = vmor %vm703, %vm704
          %v706 = vsel %vm705, %v697, %v702
          %v707 = vmul.f32 %v675, %v696
          %v708 = vmul.f32 %v676, %v706
          %v709 = vperm.slane %v604, 0
          %v710 = vmul.f32 %v707, %v709
          %v711 = vmul.f32 %v708, %v709
          %v712 = vperm.slane %v604, 1
          %v713 = vadd.f32 %v710, %v712
          %v714 = vadd.f32 %v711, %v712
          %v715 = vpack.c.bf16 %v714, %v713
          %v716 = vld [vmem:[#allocation11] sm:$0xff]
          %v717 = vld [vmem:[#allocation11 + $0x8] sm:$0xf]
          %v718 = vld [vmem:[#allocation11 + $0xc] sm:$0xff]
          %v719 = vld [vmem:[#allocation11 + $0x14] sm:$0xf]
          %v720 = vld [vmem:[#allocation11 + $0x18] sm:$0xff]
          %v721 = vld [vmem:[#allocation11 + $0x20] sm:$0xf]
          %v722 = vld [vmem:[#allocation11 + $0x24] sm:$0xff]
          %v723 = vld [vmem:[#allocation11 + $0x2c] sm:$0xf]
          %v724 = vld [vmem:[#allocation11 + $0x30] sm:$0xff]
          %v725 = vld [vmem:[#allocation11 + $0x38] sm:$0xf]
          %v726 = vld [vmem:[#allocation11 + $0x3c] sm:$0xff]
          %v727 = vld [vmem:[#allocation11 + $0x44] sm:$0xf]
          %v728 = vld [vmem:[#allocation11 + $0x48] sm:$0xff]
          %v729 = vld [vmem:[#allocation11 + $0x50] sm:$0xf]
          %v730 = vld [vmem:[#allocation11 + $0x54] sm:$0xff]
          %v731 = vld [vmem:[#allocation11 + $0x5c] sm:$0xf]
          %v732 = vld [vmem:[#allocation11 + $0x60] sm:$0xff]
          %v733 = vld [vmem:[#allocation11 + $0x68] sm:$0xf]
          %v734 = vld [vmem:[#allocation11 + $0x6c] sm:$0xff]
          %v735 = vld [vmem:[#allocation11 + $0x74] sm:$0xf]
          %v736 = vld [vmem:[#allocation11 + $0x78] sm:$0xff]
          %v737 = vld [vmem:[#allocation11 + $0x80] sm:$0xf]
          %v738 = vld [vmem:[#allocation11 + $0x84] sm:$0xff]
          %v739 = vld [vmem:[#allocation11 + $0x8c] sm:$0xf]
          %v740 = vld [vmem:[#allocation11 + $0x90] sm:$0xff]
          %v741 = vld [vmem:[#allocation11 + $0x98] sm:$0xf]
          %v742 = vld [vmem:[#allocation11 + $0x9c] sm:$0xff]
          %v743 = vld [vmem:[#allocation11 + $0xa4] sm:$0xf]
          %v744 = vld [vmem:[#allocation11 + $0xa8] sm:$0xff]
          %v745 = vld [vmem:[#allocation11 + $0xb0] sm:$0xf]
          %v746 = vld [vmem:[#allocation11 + $0xb4] sm:$0xff]
          %v747 = vld [vmem:[#allocation11 + $0xbc] sm:$0xf]
          %v780 = vunpack.c.l.b16 %v716
          %v781 = vunpack.c.h.b16 %v716
          %v782 = vunpack.c.l.b16 %v717
          %v783 = vunpack.c.l.b16 %v718
          %v784 = vunpack.c.h.b16 %v718
          %v785 = vunpack.c.l.b16 %v719
          %v786 = vunpack.c.l.b16 %v720
          %v787 = vunpack.c.h.b16 %v720
          %v788 = vunpack.c.l.b16 %v721
          %v789 = vunpack.c.l.b16 %v722
          %v790 = vunpack.c.h.b16 %v722
          %v791 = vunpack.c.l.b16 %v723
          %v792 = vunpack.c.l.b16 %v724
          %v793 = vunpack.c.h.b16 %v724
          %v794 = vunpack.c.l.b16 %v725
          %v795 = vunpack.c.l.b16 %v726
          %v796 = vunpack.c.h.b16 %v726
          %v797 = vunpack.c.l.b16 %v727
          %v798 = vunpack.c.l.b16 %v728
          %v799 = vunpack.c.h.b16 %v728
          %v800 = vunpack.c.l.b16 %v729
          %v801 = vunpack.c.l.b16 %v730
          %v802 = vunpack.c.h.b16 %v730
          %v803 = vunpack.c.l.b16 %v731
          %v804 = vunpack.c.l.b16 %v732
          %v805 = vunpack.c.h.b16 %v732
          %v806 = vunpack.c.l.b16 %v733
          %v807 = vunpack.c.l.b16 %v734
          %v808 = vunpack.c.h.b16 %v734
          %v809 = vunpack.c.l.b16 %v735
          %v810 = vunpack.c.l.b16 %v736
          %v811 = vunpack.c.h.b16 %v736
          %v812 = vunpack.c.l.b16 %v737
          %v813 = vunpack.c.l.b16 %v738
          %v814 = vunpack.c.h.b16 %v738
          %v815 = vunpack.c.l.b16 %v739
          %v816 = vunpack.c.l.b16 %v740
          %v817 = vunpack.c.h.b16 %v740
          %v818 = vunpack.c.l.b16 %v741
          %v819 = vunpack.c.l.b16 %v742
          %v820 = vunpack.c.h.b16 %v742
          %v821 = vunpack.c.l.b16 %v743
          %v822 = vunpack.c.l.b16 %v744
          %v823 = vunpack.c.h.b16 %v744
          %v824 = vunpack.c.l.b16 %v745
          %v825 = vunpack.c.l.b16 %v746
          %v826 = vunpack.c.h.b16 %v746
          %v827 = vunpack.c.l.b16 %v747
          %v828 = vpack.c.b16 %v783, %v780
          %v829 = vpack.c.b16 %v784, %v781
          %v830 = vpack.c.b16 %v785, %v782
          %v831 = vpack.c.b16 %v789, %v786
          %v832 = vpack.c.b16 %v790, %v787
          %v833 = vpack.c.b16 %v791, %v788
          %v834 = vpack.c.b16 %v795, %v792
          %v835 = vpack.c.b16 %v796, %v793
          %v836 = vpack.c.b16 %v797, %v794
          %v837 = vpack.c.b16 %v801, %v798
          %v838 = vpack.c.b16 %v802, %v799
          %v839 = vpack.c.b16 %v803, %v800
          %v840 = vpack.c.b16 %v807, %v804
          %v841 = vpack.c.b16 %v808, %v805
          %v842 = vpack.c.b16 %v809, %v806
          %v843 = vpack.c.b16 %v813, %v810
          %v844 = vpack.c.b16 %v814, %v811
          %v845 = vpack.c.b16 %v815, %v812
          %v846 = vpack.c.b16 %v819, %v816
          %v847 = vpack.c.b16 %v820, %v817
          %v848 = vpack.c.b16 %v821, %v818
          %v849 = vpack.c.b16 %v825, %v822
          %v850 = vpack.c.b16 %v826, %v823
          %v851 = vpack.c.b16 %v827, %v824
          %876 = vmatpush.bf16.msra.mxu0 %v849
          %877 = vmatpush.bf16.msra.mxu0 %v846
          %878 = vmatpush.bf16.msra.mxu0 %v843
          %879 = vmatpush.bf16.msra.mxu0 %v840
          %880 = vmatpush.bf16.msra.mxu0 %v837
          %881 = vmatpush.bf16.msra.mxu0 %v834
          %882 = vmatpush.bf16.msra.mxu0 %v831
          %883 = vmatpush.bf16.msra.mxu0 %v828
          %884 = vmatmul.bf16.gmra.mxu0 %v715
          %v885 = vpop.f32.mrf.mxu0
          %v886 = vadd.f32 0.0, %v885
          %v887 = vpop.f32.mrf.mxu0
          %v888 = vadd.f32 0.0, %v887
          %889 = vdwg.mxu0
          %890 = vmatpush.bf16.msra.mxu0 %v850
          %891 = vmatpush.bf16.msra.mxu0 %v847
          %892 = vmatpush.bf16.msra.mxu0 %v844
          %893 = vmatpush.bf16.msra.mxu0 %v841
          %894 = vmatpush.bf16.msra.mxu0 %v838
          %895 = vmatpush.bf16.msra.mxu0 %v835
          %896 = vmatpush.bf16.msra.mxu0 %v832
          %897 = vmatpush.bf16.msra.mxu0 %v829
          %898 = vmatmul.bf16.gmra.mxu0 %v715
          %v899 = vpop.f32.mrf.mxu0
          %v900 = vadd.f32 0.0, %v899
          %v901 = vpop.f32.mrf.mxu0
          %v902 = vadd.f32 0.0, %v901
          %903 = vdwg.mxu0
          %904 = vmatpush.bf16.msra.mxu0 %v851
          %905 = vmatpush.bf16.msra.mxu0 %v848
          %906 = vmatpush.bf16.msra.mxu0 %v845
          %907 = vmatpush.bf16.msra.mxu0 %v842
          %908 = vmatpush.bf16.msra.mxu0 %v839
          %909 = vmatpush.bf16.msra.mxu0 %v836
          %910 = vmatpush.bf16.msra.mxu0 %v833
          %911 = vmatpush.bf16.msra.mxu0 %v830
          %912 = vmatmul.bf16.gmra.mxu0 %v715
          %v913 = vpop.f32.mrf.mxu0
          %v914 = vadd.f32 0.0, %v913
          %v915 = vpop.f32.mrf.mxu0
          %v916 = vadd.f32 0.0, %v915
          %917 = vdwg.mxu0
          %v918 = vpack.c.bf16 %v888, %v886
          %v919 = vpack.c.bf16 %v902, %v900
          %920 = vmatpush.bf16.xpose.msra.mxu0 0
          %921 = vmatpush.bf16.xpose.msra.mxu0 0
          %922 = vmatpush.bf16.xpose.msra.mxu0 0
          %923 = vmatpush.bf16.xpose.msra.mxu0 0
          %924 = vmatpush.bf16.xpose.msra.mxu0 0
          %925 = vmatpush.bf16.xpose.msra.mxu0 0
          %926 = vmatpush.bf16.xpose.msra.mxu0 0
          %927 = vmatpush.bf16.xpose.msra.mxu0 %v919
          %928 = vmatmul.bf16.gmra.mxu0 %v918
          %v929 = vpop.f32.mrf.mxu0
          %v930 = vadd.f32 0.0, %v929
          %v931 = vpop.f32.mrf.mxu0
          %v932 = vadd.f32 0.0, %v931
          %933 = vdwg.mxu0
          %v934 = vmul.f32 %v930, 0.088388346
          %v935 = vmul.f32 %v932, 0.088388346
          %v936 = vld [vmem:[%s504] sm:$0xff]
          %v937 = vld [vmem:[%s504 + $0x8] sm:$0xff]
          %v938 = vadd.f32 %v934, %v936
          %v939 = vadd.f32 %v935, %v937
          %vm940 = vcmask 130048
          %v941 = vsel %vm940, %v938, -inf
          %942 = vmax.xlane.f32.xlu0 %v941
          %v943 = vpop.xlane.xlu0 %942
          %v944 = vsel %vm940, %v939, -inf
          %945 = vmax.xlane.f32.xlu0 %v944
          %v946 = vpop.xlane.xlu0 %945
          %v947 = vsub.f32 %v938, %v943
          %v948 = vsub.f32 %v939, %v946
          %v949 = vmul.f32 %v947, 1.442695
          %v950 = vpow.pop %v949
          %v951 = vmul.f32 %v948, 1.442695
          %v952 = vpow.pop %v951
          %v953 = vsel %vm940, %v950, 0.0
          %954 = vadd.xlane.f32.xlu0 %v953
          %v955 = vpop.xlane.xlu0 %954
          %v956 = vsel %vm940, %v952, 0.0
          %957 = vadd.xlane.f32.xlu0 %v956
          %v958 = vpop.xlane.xlu0 %957
          %v959 = vrcp.pop %v955
          %v960 = vrcp.pop %v958
          %v961 = vmul.f32 %v950, %v959
          %v962 = vmul.f32 %v952, %v960
          %v963 = vpack.c.bf16 %v962, %v961
          %v964 = vpack.c.bf16 %v916, %v914
          %v966 = vsel %vm940, %v963, 0
          %968 = vmatpush.bf16.msra.mxu0 0
          %969 = vmatpush.bf16.msra.mxu0 0
          %970 = vmatpush.bf16.msra.mxu0 0
          %971 = vmatpush.bf16.msra.mxu0 0
          %972 = vmatpush.bf16.msra.mxu0 0
          %973 = vmatpush.bf16.msra.mxu0 0
          %974 = vmatpush.bf16.msra.mxu0 0
          %975 = vmatpush.bf16.msra.mxu0 %v964
          %976 = vmatmul.bf16.gmra.mxu0 %v966
          %v977 = vpop.f32.mrf.mxu0
          %v978 = vadd.f32 0.0, %v977
          %v979 = vpop.f32.mrf.mxu0
          %v980 = vadd.f32 0.0, %v979
          %981 = vdwg.mxu0
          %v982 = vpack.c.bf16 %v980, %v978
          %v983 = vld [vmem:[#allocation12] sm:$0xf]
          %v984 = vld [vmem:[#allocation12 + $0x4] sm:$0xf]
          %v985 = vld [vmem:[#allocation12 + $0x8] sm:$0xf]
          %v986 = vld [vmem:[#allocation12 + $0xc] sm:$0xf]
          %v987 = vld [vmem:[#allocation12 + $0x10] sm:$0xf]
          %v988 = vld [vmem:[#allocation12 + $0x14] sm:$0xf]
          %v989 = vld [vmem:[#allocation12 + $0x18] sm:$0xf]
          %v990 = vld [vmem:[#allocation12 + $0x1c] sm:$0xf]
          %v991 = vld [vmem:[#allocation12 + $0x20] sm:$0xf]
          %v992 = vld [vmem:[#allocation12 + $0x24] sm:$0xf]
          %v993 = vld [vmem:[#allocation12 + $0x28] sm:$0xf]
          %v994 = vld [vmem:[#allocation12 + $0x2c] sm:$0xf]
          %v995 = vld [vmem:[#allocation12 + $0x30] sm:$0xf]
          %v996 = vld [vmem:[#allocation12 + $0x34] sm:$0xf]
          %v997 = vld [vmem:[#allocation12 + $0x38] sm:$0xf]
          %v998 = vld [vmem:[#allocation12 + $0x3c] sm:$0xf]
          %v1015 = vunpack.c.l.b16 %v983
          %v1016 = vunpack.c.l.b16 %v984
          %v1017 = vunpack.c.l.b16 %v985
          %v1018 = vunpack.c.l.b16 %v986
          %v1019 = vunpack.c.l.b16 %v987
          %v1020 = vunpack.c.l.b16 %v988
          %v1021 = vunpack.c.l.b16 %v989
          %v1022 = vunpack.c.l.b16 %v990
          %v1023 = vunpack.c.l.b16 %v991
          %v1024 = vunpack.c.l.b16 %v992
          %v1025 = vunpack.c.l.b16 %v993
          %v1026 = vunpack.c.l.b16 %v994
          %v1027 = vunpack.c.l.b16 %v995
          %v1028 = vunpack.c.l.b16 %v996
          %v1029 = vunpack.c.l.b16 %v997
          %v1030 = vunpack.c.l.b16 %v998
          %v1031 = vpack.c.b16 %v1016, %v1015
          %v1032 = vpack.c.b16 %v1018, %v1017
          %v1033 = vpack.c.b16 %v1020, %v1019
          %v1034 = vpack.c.b16 %v1022, %v1021
          %v1035 = vpack.c.b16 %v1024, %v1023
          %v1036 = vpack.c.b16 %v1026, %v1025
          %v1037 = vpack.c.b16 %v1028, %v1027
          %v1038 = vpack.c.b16 %v1030, %v1029
          %1047 = vmatpush.bf16.msra.mxu0 %v1038
          %1048 = vmatpush.bf16.msra.mxu0 %v1037
          %1049 = vmatpush.bf16.msra.mxu0 %v1036
          %1050 = vmatpush.bf16.msra.mxu0 %v1035
          %1051 = vmatpush.bf16.msra.mxu0 %v1034
          %1052 = vmatpush.bf16.msra.mxu0 %v1033
          %1053 = vmatpush.bf16.msra.mxu0 %v1032
          %1054 = vmatpush.bf16.msra.mxu0 %v1031
          %1055 = vmatmul.bf16.gmra.mxu0 %v982
          %v1056 = vpop.f32.mrf.mxu0
          %v1057 = vadd.f32 0.0, %v1056
          %v1058 = vpop.f32.mrf.mxu0
          %v1059 = vadd.f32 0.0, %v1058
          %1060 = vdwg.mxu0
          %v1061 = vadd.f32 %v660, %v1057
          %v1062 = vadd.f32 %v661, %v1059
          %1063 = vadd.xlane.f32.xlu0 %v1061
          %v1064 = vpop.xlane.xlu0 %1063
          %1065 = vadd.xlane.f32.xlu0 %v1062
          %v1066 = vpop.xlane.xlu0 %1065
          %v1067 = vmul.f32 %v1064, %v672
          %v1068 = vmul.f32 %v1066, %v672
          %v1069 = vsub.f32 %v1061, %v1067
          %v1070 = vsub.f32 %v1062, %v1068
          %v1071 = vmul.f32 %v1069, %v1069
          %v1072 = vmul.f32 %v1070, %v1070
          %1073 = vadd.xlane.f32.xlu0 %v1071
          %v1074 = vpop.xlane.xlu0 %1073
          %1075 = vadd.xlane.f32.xlu0 %v1072
          %v1076 = vpop.xlane.xlu0 %1075
          %v1077 = vmul.f32 %v1074, %v672
          %v1078 = vmul.f32 %v1076, %v672
          %v1079 = vadd.f32 %v1077, 1e-05
          %v1080 = vadd.f32 %v1078, 1e-05
          %v1081 = vrsqrt.pop %v1079
          %v1082 = vmul.f32 %v1081, %v1079
          %v1083 = vmul.f32 %v1082, %v1081
          %v1084 = vmul.f32 0.5, %v1083
          %v1085 = vsub.f32 1.5, %v1084
          %v1086 = vmul.f32 %v1081, %v1085
          %vm1087 = vweird.f32 %v1079
          %vm1088 = vweird.f32 %v1081
          %vm1089 = vmor %vm1087, %vm1088
          %v1090 = vsel %vm1089, %v1081, %v1086
          %v1091 = vrsqrt.pop %v1080
          %v1092 = vmul.f32 %v1091, %v1080
          %v1093 = vmul.f32 %v1092, %v1091
          %v1094 = vmul.f32 0.5, %v1093
          %v1095 = vsub.f32 1.5, %v1094
          %v1096 = vmul.f32 %v1091, %v1095
          %vm1097 = vweird.f32 %v1080
          %vm1098 = vweird.f32 %v1091
          %vm1099 = vmor %vm1097, %vm1098
          %v1100 = vsel %vm1099, %v1091, %v1096
          %v1101 = vmul.f32 %v1069, %v1090
          %v1102 = vmul.f32 %v1070, %v1100
          %v1103 = vperm.slane %v604, 2
          %v1104 = vmul.f32 %v1101, %v1103
          %v1105 = vmul.f32 %v1102, %v1103
          %v1106 = vperm.slane %v604, 3
          %v1107 = vadd.f32 %v1104, %v1106
          %v1108 = vadd.f32 %v1105, %v1106
          %v1109 = vpack.c.bf16 %v1108, %v1107
          %v1110 = vld [vmem:[#allocation14] sm:$0xff]
          %v1111 = vld [vmem:[#allocation14 + $0x8] sm:$0xff]
          %v1112 = vld [vmem:[#allocation14 + $0x10] sm:$0xff]
          %v1113 = vld [vmem:[#allocation14 + $0x18] sm:$0xff]
          %v1114 = vld [vmem:[#allocation14 + $0x20] sm:$0xff]
          %v1115 = vld [vmem:[#allocation14 + $0x28] sm:$0xff]
          %v1116 = vld [vmem:[#allocation14 + $0x30] sm:$0xff]
          %v1117 = vld [vmem:[#allocation14 + $0x38] sm:$0xff]
          %v1118 = vld [vmem:[#allocation14 + $0x40] sm:$0xff]
          %v1119 = vld [vmem:[#allocation14 + $0x48] sm:$0xff]
          %v1120 = vld [vmem:[#allocation14 + $0x50] sm:$0xff]
          %v1121 = vld [vmem:[#allocation14 + $0x58] sm:$0xff]
          %v1122 = vld [vmem:[#allocation14 + $0x60] sm:$0xff]
          %v1123 = vld [vmem:[#allocation14 + $0x68] sm:$0xff]
          %v1124 = vld [vmem:[#allocation14 + $0x70] sm:$0xff]
          %v1125 = vld [vmem:[#allocation14 + $0x78] sm:$0xff]
          %v1142 = vunpack.c.l.b16 %v1110
          %v1143 = vunpack.c.h.b16 %v1110
          %v1144 = vunpack.c.l.b16 %v1111
          %v1145 = vunpack.c.h.b16 %v1111
          %v1146 = vunpack.c.l.b16 %v1112
          %v1147 = vunpack.c.h.b16 %v1112
          %v1148 = vunpack.c.l.b16 %v1113
          %v1149 = vunpack.c.h.b16 %v1113
          %v1150 = vunpack.c.l.b16 %v1114
          %v1151 = vunpack.c.h.b16 %v1114
          %v1152 = vunpack.c.l.b16 %v1115
          %v1153 = vunpack.c.h.b16 %v1115
          %v1154 = vunpack.c.l.b16 %v1116
          %v1155 = vunpack.c.h.b16 %v1116
          %v1156 = vunpack.c.l.b16 %v1117
          %v1157 = vunpack.c.h.b16 %v1117
          %v1158 = vunpack.c.l.b16 %v1118
          %v1159 = vunpack.c.h.b16 %v1118
          %v1160 = vunpack.c.l.b16 %v1119
          %v1161 = vunpack.c.h.b16 %v1119
          %v1162 = vunpack.c.l.b16 %v1120
          %v1163 = vunpack.c.h.b16 %v1120
          %v1164 = vunpack.c.l.b16 %v1121
          %v1165 = vunpack.c.h.b16 %v1121
          %v1166 = vunpack.c.l.b16 %v1122
          %v1167 = vunpack.c.h.b16 %v1122
          %v1168 = vunpack.c.l.b16 %v1123
          %v1169 = vunpack.c.h.b16 %v1123
          %v1170 = vunpack.c.l.b16 %v1124
          %v1171 = vunpack.c.h.b16 %v1124
          %v1172 = vunpack.c.l.b16 %v1125
          %v1173 = vunpack.c.h.b16 %v1125
          %v1174 = vpack.c.b16 %v1144, %v1142
          %v1175 = vpack.c.b16 %v1145, %v1143
          %v1176 = vpack.c.b16 %v1148, %v1146
          %v1177 = vpack.c.b16 %v1149, %v1147
          %v1178 = vpack.c.b16 %v1152, %v1150
          %v1179 = vpack.c.b16 %v1153, %v1151
          %v1180 = vpack.c.b16 %v1156, %v1154
          %v1181 = vpack.c.b16 %v1157, %v1155
          %v1182 = vpack.c.b16 %v1160, %v1158
          %v1183 = vpack.c.b16 %v1161, %v1159
          %v1184 = vpack.c.b16 %v1164, %v1162
          %v1185 = vpack.c.b16 %v1165, %v1163
          %v1186 = vpack.c.b16 %v1168, %v1166
          %v1187 = vpack.c.b16 %v1169, %v1167
          %v1188 = vpack.c.b16 %v1172, %v1170
          %v1189 = vpack.c.b16 %v1173, %v1171
          %1206 = vmatpush.bf16.msra.mxu0 %v1188
          %1207 = vmatpush.bf16.msra.mxu0 %v1186
          %1208 = vmatpush.bf16.msra.mxu0 %v1184
          %1209 = vmatpush.bf16.msra.mxu0 %v1182
          %1210 = vmatpush.bf16.msra.mxu0 %v1180
          %1211 = vmatpush.bf16.msra.mxu0 %v1178
          %1212 = vmatpush.bf16.msra.mxu0 %v1176
          %1213 = vmatpush.bf16.msra.mxu0 %v1174
          %1214 = vmatmul.bf16.gmra.mxu0 %v1109
          %v1215 = vpop.f32.mrf.mxu0
          %v1216 = vadd.f32 0.0, %v1215
          %v1217 = vpop.f32.mrf.mxu0
          %v1218 = vadd.f32 0.0, %v1217
          %1219 = vdwg.mxu0
          %1220 = vmatpush.bf16.msra.mxu0 %v1189
          %1221 = vmatpush.bf16.msra.mxu0 %v1187
          %1222 = vmatpush.bf16.msra.mxu0 %v1185
          %1223 = vmatpush.bf16.msra.mxu0 %v1183
          %1224 = vmatpush.bf16.msra.mxu0 %v1181
          %1225 = vmatpush.bf16.msra.mxu0 %v1179
          %1226 = vmatpush.bf16.msra.mxu0 %v1177
          %1227 = vmatpush.bf16.msra.mxu0 %v1175
          %1228 = vmatmul.bf16.gmra.mxu0 %v1109
          %v1229 = vpop.f32.mrf.mxu0
          %v1230 = vadd.f32 0.0, %v1229
          %v1231 = vpop.f32.mrf.mxu0
          %v1232 = vadd.f32 0.0, %v1231
          %1233 = vdwg.mxu0
          %v1234 = vmul.f32 %v1216, %v1216
          %v1235 = vmul.f32 %v1230, %v1230
          %v1236 = vmul.f32 %v1218, %v1218
          %v1237 = vmul.f32 %v1232, %v1232
          %v1238 = vmul.f32 %v1216, %v1234
          %v1239 = vmul.f32 %v1230, %v1235
          %v1240 = vmul.f32 %v1218, %v1236
          %v1241 = vmul.f32 %v1232, %v1237
          %v1242 = vmul.f32 %v1238, 0.044715
          %v1243 = vmul.f32 %v1239, 0.044715
          %v1244 = vmul.f32 %v1240, 0.044715
          %v1245 = vmul.f32 %v1241, 0.044715
          %v1246 = vadd.f32 %v1216, %v1242
          %v1247 = vadd.f32 %v1230, %v1243
          %v1248 = vadd.f32 %v1218, %v1244
          %v1249 = vadd.f32 %v1232, %v1245
          %v1250 = vmul.f32 %v1246, 0.7978846
          %v1251 = vmul.f32 %v1247, 0.7978846
          %v1252 = vmul.f32 %v1248, 0.7978846
          %v1253 = vmul.f32 %v1249, 0.7978846
          %v1254 = vtanh.pop %v1250
          %v1255 = vtanh.pop %v1251
          %v1256 = vtanh.pop %v1252
          %v1257 = vtanh.pop %v1253
          %v1258 = vadd.f32 %v1254, 1.0
          %v1259 = vadd.f32 %v1255, 1.0
          %v1260 = vadd.f32 %v1256, 1.0
          %v1261 = vadd.f32 %v1257, 1.0
          %v1262 = vmul.f32 %v1258, 0.5
          %v1263 = vmul.f32 %v1259, 0.5
          %v1264 = vmul.f32 %v1260, 0.5
          %v1265 = vmul.f32 %v1261, 0.5
          %v1266 = vmul.f32 %v1216, %v1262
          %v1267 = vmul.f32 %v1230, %v1263
          %v1268 = vmul.f32 %v1218, %v1264
          %v1269 = vmul.f32 %v1232, %v1265
          %v1270 = vpack.c.bf16 %v1268, %v1266
          %v1271 = vpack.c.bf16 %v1269, %v1267
          %v1272 = vld [vmem:[#allocation15] sm:$0xf]
          %v1273 = vld [vmem:[#allocation15 + $0x4] sm:$0xf]
          %v1274 = vld [vmem:[#allocation15 + $0x8] sm:$0xf]
          %v1275 = vld [vmem:[#allocation15 + $0xc] sm:$0xf]
          %v1276 = vld [vmem:[#allocation15 + $0x10] sm:$0xf]
          %v1277 = vld [vmem:[#allocation15 + $0x14] sm:$0xf]
          %v1278 = vld [vmem:[#allocation15 + $0x18] sm:$0xf]
          %v1279 = vld [vmem:[#allocation15 + $0x1c] sm:$0xf]
          %v1280 = vld [vmem:[#allocation15 + $0x20] sm:$0xf]
          %v1281 = vld [vmem:[#allocation15 + $0x24] sm:$0xf]
          %v1282 = vld [vmem:[#allocation15 + $0x28] sm:$0xf]
          %v1283 = vld [vmem:[#allocation15 + $0x2c] sm:$0xf]
          %v1284 = vld [vmem:[#allocation15 + $0x30] sm:$0xf]
          %v1285 = vld [vmem:[#allocation15 + $0x34] sm:$0xf]
          %v1286 = vld [vmem:[#allocation15 + $0x38] sm:$0xf]
          %v1287 = vld [vmem:[#allocation15 + $0x3c] sm:$0xf]
          %v1288 = vld [vmem:[#allocation15 + $0x40] sm:$0xf]
          %v1289 = vld [vmem:[#allocation15 + $0x44] sm:$0xf]
          %v1290 = vld [vmem:[#allocation15 + $0x48] sm:$0xf]
          %v1291 = vld [vmem:[#allocation15 + $0x4c] sm:$0xf]
          %v1292 = vld [vmem:[#allocation15 + $0x50] sm:$0xf]
          %v1293 = vld [vmem:[#allocation15 + $0x54] sm:$0xf]
          %v1294 = vld [vmem:[#allocation15 + $0x58] sm:$0xf]
          %v1295 = vld [vmem:[#allocation15 + $0x5c] sm:$0xf]
          %v1296 = vld [vmem:[#allocation15 + $0x60] sm:$0xf]
          %v1297 = vld [vmem:[#allocation15 + $0x64] sm:$0xf]
          %v1298 = vld [vmem:[#allocation15 + $0x68] sm:$0xf]
          %v1299 = vld [vmem:[#allocation15 + $0x6c] sm:$0xf]
          %v1300 = vld [vmem:[#allocation15 + $0x70] sm:$0xf]
          %v1301 = vld [vmem:[#allocation15 + $0x74] sm:$0xf]
          %v1302 = vld [vmem:[#allocation15 + $0x78] sm:$0xf]
          %v1303 = vld [vmem:[#allocation15 + $0x7c] sm:$0xf]
          %v1336 = vunpack.c.l.b16 %v1272
          %v1337 = vunpack.c.l.b16 %v1273
          %v1338 = vunpack.c.l.b16 %v1274
          %v1339 = vunpack.c.l.b16 %v1275
          %v1340 = vunpack.c.l.b16 %v1276
          %v1341 = vunpack.c.l.b16 %v1277
          %v1342 = vunpack.c.l.b16 %v1278
          %v1343 = vunpack.c.l.b16 %v1279
          %v1344 = vunpack.c.l.b16 %v1280
          %v1345 = vunpack.c.l.b16 %v1281
          %v1346 = vunpack.c.l.b16 %v1282
          %v1347 = vunpack.c.l.b16 %v1283
          %v1348 = vunpack.c.l.b16 %v1284
          %v1349 = vunpack.c.l.b16 %v1285
          %v1350 = vunpack.c.l.b16 %v1286
          %v1351 = vunpack.c.l.b16 %v1287
          %v1352 = vunpack.c.l.b16 %v1288
          %v1353 = vunpack.c.l.b16 %v1289
          %v1354 = vunpack.c.l.b16 %v1290
          %v1355 = vunpack.c.l.b16 %v1291
          %v1356 = vunpack.c.l.b16 %v1292
          %v1357 = vunpack.c.l.b16 %v1293
          %v1358 = vunpack.c.l.b16 %v1294
          %v1359 = vunpack.c.l.b16 %v1295
          %v1360 = vunpack.c.l.b16 %v1296
          %v1361 = vunpack.c.l.b16 %v1297
          %v1362 = vunpack.c.l.b16 %v1298
          %v1363 = vunpack.c.l.b16 %v1299
          %v1364 = vunpack.c.l.b16 %v1300
          %v1365 = vunpack.c.l.b16 %v1301
          %v1366 = vunpack.c.l.b16 %v1302
          %v1367 = vunpack.c.l.b16 %v1303
          %v1368 = vpack.c.b16 %v1337, %v1336
          %v1369 = vpack.c.b16 %v1339, %v1338
          %v1370 = vpack.c.b16 %v1341, %v1340
          %v1371 = vpack.c.b16 %v1343, %v1342
          %v1372 = vpack.c.b16 %v1345, %v1344
          %v1373 = vpack.c.b16 %v1347, %v1346
          %v1374 = vpack.c.b16 %v1349, %v1348
          %v1375 = vpack.c.b16 %v1351, %v1350
          %v1376 = vpack.c.b16 %v1353, %v1352
          %v1377 = vpack.c.b16 %v1355, %v1354
          %v1378 = vpack.c.b16 %v1357, %v1356
          %v1379 = vpack.c.b16 %v1359, %v1358
          %v1380 = vpack.c.b16 %v1361, %v1360
          %v1381 = vpack.c.b16 %v1363, %v1362
          %v1382 = vpack.c.b16 %v1365, %v1364
          %v1383 = vpack.c.b16 %v1367, %v1366
          %1400 = vmatpush.bf16.msra.mxu0 %v1375
          %1401 = vmatpush.bf16.msra.mxu0 %v1374
          %1402 = vmatpush.bf16.msra.mxu0 %v1373
          %1403 = vmatpush.bf16.msra.mxu0 %v1372
          %1404 = vmatpush.bf16.msra.mxu0 %v1371
          %1405 = vmatpush.bf16.msra.mxu0 %v1370
          %1406 = vmatpush.bf16.msra.mxu0 %v1369
          %1407 = vmatpush.bf16.msra.mxu0 %v1368
          %1408 = vmatmul.bf16.gmra.mxu0 %v1270
          %v1409 = vpop.f32.mrf.mxu0
          %v1410 = vadd.f32 0.0, %v1409
          %v1411 = vpop.f32.mrf.mxu0
          %v1412 = vadd.f32 0.0, %v1411
          %1413 = vdwg.mxu0
          %1414 = vmatpush.bf16.msra.mxu0 %v1383
          %1415 = vmatpush.bf16.msra.mxu0 %v1382
          %1416 = vmatpush.bf16.msra.mxu0 %v1381
          %1417 = vmatpush.bf16.msra.mxu0 %v1380
          %1418 = vmatpush.bf16.msra.mxu0 %v1379
          %1419 = vmatpush.bf16.msra.mxu0 %v1378
          %1420 = vmatpush.bf16.msra.mxu0 %v1377
          %1421 = vmatpush.bf16.msra.mxu0 %v1376
          %1422 = vmatmul.bf16.gmra.mxu0 %v1271
          %v1423 = vpop.f32.mrf.mxu0
          %v1424 = vadd.f32 %v1410, %v1423
          %v1425 = vpop.f32.mrf.mxu0
          %v1426 = vadd.f32 %v1412, %v1425
          %1427 = vdwg.mxu0
          %v1428 = vadd.f32 %v1061, %v1424
          %v1429 = vadd.f32 %v1062, %v1426
          %1430 = vadd.xlane.f32.xlu0 %v1428
          %v1431 = vpop.xlane.xlu0 %1430
          %1432 = vadd.xlane.f32.xlu0 %v1429
          %v1433 = vpop.xlane.xlu0 %1432
          %v1434 = vmul.f32 %v1431, %v672
          %v1435 = vmul.f32 %v1433, %v672
          %v1436 = vsub.f32 %v1428, %v1434
          %v1437 = vsub.f32 %v1429, %v1435
          %v1438 = vmul.f32 %v1436, %v1436
          %v1439 = vmul.f32 %v1437, %v1437
          %1440 = vadd.xlane.f32.xlu0 %v1438
          %v1441 = vpop.xlane.xlu0 %1440
          %1442 = vadd.xlane.f32.xlu0 %v1439
          %v1443 = vpop.xlane.xlu0 %1442
          %v1444 = vmul.f32 %v1441, %v672
          %v1445 = vmul.f32 %v1443, %v672
          %v1446 = vadd.f32 %v1444, 1e-05
          %v1447 = vadd.f32 %v1445, 1e-05
          %v1448 = vrsqrt.pop %v1446
          %v1449 = vmul.f32 %v1448, %v1446
          %v1450 = vmul.f32 %v1449, %v1448
          %v1451 = vmul.f32 0.5, %v1450
          %v1452 = vsub.f32 1.5, %v1451
          %v1453 = vmul.f32 %v1448, %v1452
          %vm1454 = vweird.f32 %v1446
          %vm1455 = vweird.f32 %v1448
          %vm1456 = vmor %vm1454, %vm1455
          %v1457 = vsel %vm1456, %v1448, %v1453
          %v1458 = vrsqrt.pop %v1447
          %v1459 = vmul.f32 %v1458, %v1447
          %v1460 = vmul.f32 %v1459, %v1458
          %v1461 = vmul.f32 0.5, %v1460
          %v1462 = vsub.f32 1.5, %v1461
          %v1463 = vmul.f32 %v1458, %v1462
          %vm1464 = vweird.f32 %v1447
          %vm1465 = vweird.f32 %v1458
          %vm1466 = vmor %vm1464, %vm1465
          %v1467 = vsel %vm1466, %v1458, %v1463
          %v1468 = vmul.f32 %v1436, %v1457
          %v1469 = vmul.f32 %v1437, %v1467
          %v1470 = vperm.slane %v604, 4
          %v1471 = vmul.f32 %v1468, %v1470
          %v1472 = vmul.f32 %v1469, %v1470
          %v1473 = vperm.slane %v604, 5
          %v1474 = vadd.f32 %v1471, %v1473
          %v1475 = vadd.f32 %v1472, %v1473
          %1476 = vst [vmem:[#allocation2] sm:$0xff] %v1474
          %1477 = vst [vmem:[#allocation2 + $0x8] sm:$0xff] %v1475
        $region104: #{tpu_custom_call.1} parent=59 // pred_fallthru
          _
        %v1478 = vld [vmem:[#allocation2] sm:$0xff]
        %v1479 = vld [vmem:[#allocation2 + $0x8] sm:$0xff]
        %v1480 = vpack.c.bf16 %v1479, %v1478
        %v1481 = vld [vmem:[#allocation18] sm:$0xff]
        %v1482 = vld [vmem:[#allocation18 + $0x8] sm:$0xff]
        %v1483 = vld [vmem:[#allocation18 + $0x10] sm:$0xff]
        %v1484 = vld [vmem:[#allocation18 + $0x18] sm:$0xff]
        %v1485 = vld [vmem:[#allocation18 + $0x20] sm:$0xff]
        %v1486 = vld [vmem:[#allocation18 + $0x28] sm:$0xff]
        %v1487 = vld [vmem:[#allocation18 + $0x30] sm:$0xff]
        %v1488 = vld [vmem:[#allocation18 + $0x38] sm:$0xff]
        %v1489 = vld [vmem:[#allocation18 + $0x40] sm:$0xff]
        %v1490 = vld [vmem:[#allocation18 + $0x48] sm:$0xff]
        %v1491 = vld [vmem:[#allocation18 + $0x50] sm:$0xff]
        %v1492 = vld [vmem:[#allocation18 + $0x58] sm:$0xff]
        %v1493 = vld [vmem:[#allocation18 + $0x60] sm:$0xff]
        %v1494 = vld [vmem:[#allocation18 + $0x68] sm:$0xff]
        %v1495 = vld [vmem:[#allocation18 + $0x70] sm:$0xff]
        %v1496 = vld [vmem:[#allocation18 + $0x78] sm:$0xff]
        %v1513 = vunpack.c.l.b16 %v1481
        %v1514 = vunpack.c.h.b16 %v1481
        %v1515 = vunpack.c.l.b16 %v1482
        %v1516 = vunpack.c.h.b16 %v1482
        %v1517 = vunpack.c.l.b16 %v1483
        %v1518 = vunpack.c.h.b16 %v1483
        %v1519 = vunpack.c.l.b16 %v1484
        %v1520 = vunpack.c.h.b16 %v1484
        %v1521 = vunpack.c.l.b16 %v1485
        %v1522 = vunpack.c.h.b16 %v1485
        %v1523 = vunpack.c.l.b16 %v1486
        %v1524 = vunpack.c.h.b16 %v1486
        %v1525 = vunpack.c.l.b16 %v1487
        %v1526 = vunpack.c.h.b16 %v1487
        %v1527 = vunpack.c.l.b16 %v1488
        %v1528 = vunpack.c.h.b16 %v1488
        %v1529 = vunpack.c.l.b16 %v1489
        %v1530 = vunpack.c.h.b16 %v1489
        %v1531 = vunpack.c.l.b16 %v1490
        %v1532 = vunpack.c.h.b16 %v1490
        %v1533 = vunpack.c.l.b16 %v1491
        %v1534 = vunpack.c.h.b16 %v1491
        %v1535 = vunpack.c.l.b16 %v1492
        %v1536 = vunpack.c.h.b16 %v1492
        %v1537 = vunpack.c.l.b16 %v1493
        %v1538 = vunpack.c.h.b16 %v1493
        %v1539 = vunpack.c.l.b16 %v1494
        %v1540 = vunpack.c.h.b16 %v1494
        %v1541 = vunpack.c.l.b16 %v1495
        %v1542 = vunpack.c.h.b16 %v1495
        %v1543 = vunpack.c.l.b16 %v1496
        %v1544 = vunpack.c.h.b16 %v1496
        %v1545 = vpack.c.b16 %v1515, %v1513
        %v1546 = vpack.c.b16 %v1516, %v1514
        %v1547 = vpack.c.b16 %v1519, %v1517
        %v1548 = vpack.c.b16 %v1520, %v1518
        %v1549 = vpack.c.b16 %v1523, %v1521
        %v1550 = vpack.c.b16 %v1524, %v1522
        %v1551 = vpack.c.b16 %v1527, %v1525
        %v1552 = vpack.c.b16 %v1528, %v1526
        %v1553 = vpack.c.b16 %v1531, %v1529
        %v1554 = vpack.c.b16 %v1532, %v1530
        %v1555 = vpack.c.b16 %v1535, %v1533
        %v1556 = vpack.c.b16 %v1536, %v1534
        %v1557 = vpack.c.b16 %v1539, %v1537
        %v1558 = vpack.c.b16 %v1540, %v1538
        %v1559 = vpack.c.b16 %v1543, %v1541
        %v1560 = vpack.c.b16 %v1544, %v1542
        %1577 = vmatpush.bf16.msra.mxu0 %v1559
        %1578 = vmatpush.bf16.msra.mxu0 %v1557
        %1579 = vmatpush.bf16.msra.mxu0 %v1555
        %1580 = vmatpush.bf16.msra.mxu0 %v1553
        %1581 = vmatpush.bf16.msra.mxu0 %v1551
        %1582 = vmatpush.bf16.msra.mxu0 %v1549
        %1583 = vmatpush.bf16.msra.mxu0 %v1547
        %1584 = vmatpush.bf16.msra.mxu0 %v1545
        %1585 = vmatmul.bf16.gmra.mxu0 %v1480
        %v1586 = vpop.f32.mrf.mxu0
        %v1587 = vadd.f32 0.0, %v1586
        %v1588 = vpop.f32.mrf.mxu0
        %v1589 = vadd.f32 0.0, %v1588
        %1590 = vdwg.mxu0
        %1591 = vmatpush.bf16.msra.mxu0 %v1560
        %1592 = vmatpush.bf16.msra.mxu0 %v1558
        %1593 = vmatpush.bf16.msra.mxu0 %v1556
        %1594 = vmatpush.bf16.msra.mxu0 %v1554
        %1595 = vmatpush.bf16.msra.mxu0 %v1552
        %1596 = vmatpush.bf16.msra.mxu0 %v1550
        %1597 = vmatpush.bf16.msra.mxu0 %v1548
        %1598 = vmatpush.bf16.msra.mxu0 %v1546
        %1599 = vmatmul.bf16.gmra.mxu0 %v1480
        %v1600 = vpop.f32.mrf.mxu0
        %v1601 = vadd.f32 0.0, %v1600
        %v1602 = vpop.f32.mrf.mxu0
        %v1603 = vadd.f32 0.0, %v1602
        %1604 = vdwg.mxu0
        %1605 = vst [vmem:[%s596] sm:$0xff] %v1587
        %1606 = vst [vmem:[%s596 + $0x8] sm:$0xff] %v1601
        %1607 = vst [vmem:[%s596 + $0x10] sm:$0xff] %v1589
        %1608 = vst [vmem:[%s596 + $0x18] sm:$0xff] %v1603
        %s1609 = sand.u32 %s286, 1
        %s1610 = scalar_lea.sflag [#allocation5], %s1609
        %s1611 = sand.u32 %s286, 1
        %s1612 = smul.addr %s1611, 32
        %s1613 = scalar_lea.vmem [#allocation20], %s1612
        // Predicated region
        $region105: #{tpu_custom_call.1} parent=59 // pred_check
          %p1614 = pneg %p296
        $region106: #{tpu_custom_call.1} parent=59 // pred_check_branch
          %1616 = sbr.rel (%p1614) target = $region108
        $region107: #{tpu_custom_call.1} parent=59 // pred_region
          %s1617 = smul.u32 2, %s39
          %1619 = vsyncadd %s1610, 0
          %s1620 = smul.addr %s38, 4
          %s1621 = sadd.s32 %s1617, %s1620
          %s1622 = smul.addr %s1621, 8
          %s1623 = scalar_lea.hbm %s10, %s1622
          %s1624 = sshll.u32 %s1613, 4
          %s1625 = int_to_ptr.vmem [resolvable:$true] %s1624
          %s1626 = sshll.u32 %s1623, 4
          %s1627 = int_to_ptr.hbm [resolvable:$true] %s1626
          %1632 = dma.vmem_to_hbm [thread:$0]  %s1625, 512, %s1627, %s1610, 256, 256, 16
        $region108: #{tpu_custom_call.1} parent=59 // pred_fallthru
          _
      $region60: #{tpu_custom_call.1} parent=5 // pred_fallthru
        _
      %p1633 = scmp.le.s32.totalorder 2, %s29
      // Predicated region
      $region109: #{tpu_custom_call.1} parent=5 // pred_check
        %p1634 = pneg %p1633
      $region110: #{tpu_custom_call.1} parent=5 // pred_check_branch
        %1636 = sbr.rel (%p1634) target = $region112
      $region111: #{tpu_custom_call.1} parent=5 // pred_region
        %s1637 = ssub.s32 %s29, 2
        // Predicated region
        $region113: #{tpu_custom_call.1} parent=111 // pred_check
          %p1638 = pneg %p302
        $region114: #{tpu_custom_call.1} parent=111 // pred_check_branch
          %1640 = sbr.rel (%p1638) target = $region116
        $region115: #{tpu_custom_call.1} parent=111 // pred_region
          %s1641 = sand.u32 %s287, 1
          %s1642 = scalar_lea.sflag [#allocation5], %s1641
          %s1643 = sand.u32 %s287, 1
          %s1644 = smul.addr %s1643, 32
          %s1645 = scalar_lea.vmem [#allocation20], %s1644
          %1647 = dma.done %s1642, 512
        $region116: #{tpu_custom_call.1} parent=111 // pred_fallthru
          _
      $region112: #{tpu_custom_call.1} parent=5 // pred_fallthru
        _
    $region6: #{tpu_custom_call.1} parent=1 // loop_footer
      %s33 = sadd.s32 1, %s29
    $region7: #{tpu_custom_call.1} parent=1 // loop_footer_branch
      %28 = sbr.rel target = $region3
    $region8: #{tpu_custom_call.1} parent=1 // loop_exit
      _
    %1648 = vsyncpa [#allocation4], 1
    %s1649 = scalar_lea.sflag [#allocation4], 1
    %1650 = vsyncpa %s1649, 1
    %1651 = vsyncpa [#allocation7], 1
    %s1652 = scalar_lea.sflag [#allocation7], 1
    %1653 = vsyncpa %s1652, 1
    %1654 = vsyncpa [#allocation10], 1
    %1655 = vsyncpa [#allocation13], 1
    %1656 = vsyncpa [#allocation16], 1
    %1657 = vsyncpa [#allocation19], 1
    %1658 = vsyncpa [#allocation5], 1
    %s1659 = scalar_lea.sflag [#allocation5], 1
    %1660 = vsyncpa %s1659, 1

</llo_original>
